<compile_context>
chip_gen: v6e
topology: v6e:2x2x1
jax: 0.10.0
libtpu: 0.0.40
codegen_flags: <defaults>
</compile_context>

<pallas_src>
import functools

import jax
import jax.numpy as jnp
from jax.experimental import pallas as pl
from jax.experimental.pallas import tpu as pltpu


def _cdiv(a, b):
    return -(-a // b)


def _mhfa_kernel(x_ref, p_ref, o_ref, *, H, eps):
    """MultiHeadFactorAttention forward for one batch tile.

    x_ref: (Bt, N, H)   input slab, natural (batch, feature, hidden) layout.
    p_ref: (H, 3H + 4)  packed params:
             [:, 0:H]  = W.weight   [:, H:2H] = V.weight   [:, 2H:3H] = I_H
             [:, 3H]   = W.bias     [:, 3H+1] = V.bias
             [:, 3H+2] = ln.gamma   [:, 3H+3] = ln.beta
    o_ref: (Bt, H, N)   output slab, lane-dense transposed layout.
    """
    Bt = x_ref.shape[0]
    f32 = jnp.float32
    x = x_ref[...].astype(f32)                            # (Bt, N, H)
    P = p_ref[...]                                        # (H, 3H+4) f32

    Wm = P[:, 0:H]                                        # (H, H)
    Vm = P[:, H:2 * H]                                    # (H, H)
    Im = P[:, 2 * H:3 * H]                                # (H, H) identity
    bW    = P[:, 3 * H + 0:3 * H + 1][None]               # (1, H, 1)
    bV    = P[:, 3 * H + 1:3 * H + 2][None]
    gamma = P[:, 3 * H + 2:3 * H + 3][None]
    beta  = P[:, 3 * H + 3:3 * H + 4][None]

    # Broadcast the tiny (H, H) matrices once (hoisted; JAX does not CSE
    # broadcast_in_dim) so the contractions become batched MXU matmuls.
    Wb = jnp.broadcast_to(Wm[None], (Bt, H, H))
    Vb = jnp.broadcast_to(Vm[None], (Bt, H, H))
    Ib = jnp.broadcast_to(Im[None], (Bt, H, H))

    hi = jax.lax.Precision.HIGHEST
    # MXU "NT" batched matmuls (contract the minor dims of both operands):
    #   xt[b,h,n]   = x[b,n,h]                (identity lhs -> in-kernel transpose)
    #   upre[b,h,n] = sum_j W[h,j] x[b,n,j]   (W linear fused with the transpose)
    xt = jnp.einsum('bhj,bnj->bhn', Ib, x,
                    precision=hi, preferred_element_type=f32)   # (Bt, H, N)
    u = jnp.tanh(jnp.einsum('bhj,bnj->bhn', Wb, x,
                            precision=hi, preferred_element_type=f32) + bW)

    # scores[b,h,n] = sum_j V[h,j] u[b,j,n] + bV[h]   ("NN" batched matmul)
    scores = jnp.einsum('bhj,bjn->bhn', Vb, u,
                        precision=hi, preferred_element_type=f32) + bV

    # Softmax over the feature axis N (lane axis).
    m = jnp.max(scores, axis=-1, keepdims=True)           # (Bt, H, 1)
    e = jnp.exp(scores - m)
    s = jnp.sum(e, axis=-1, keepdims=True)
    attn = e * (1.0 / s)                                   # exact, tiny divide

    # (u_split * attn_weights).sum over heads; head_dim == 1 -> one VPU mul
    # plus one sublane reduction.
    w = jnp.sum(u * attn, axis=1, keepdims=True)           # (Bt, 1, N)

    # TODO(synk): nn.Dropout(0.1) omitted (eval/inference identity) -- do not
    # use this kernel for training as-is.

    # layer_norm(x + x * weighted) over the hidden (sublane) axis.
    y = xt * (1.0 + w)                                     # fold residual add
    mean = jnp.mean(y, axis=1, keepdims=True)              # (Bt, 1, N)
    ctr = y - mean
    var = jnp.mean(ctr * ctr, axis=1, keepdims=True)
    o_ref[...] = (ctr * jax.lax.rsqrt(var + eps) * gamma + beta).astype(o_ref.dtype)


def _vmem_capacity_bytes():
    """Best-effort per-core VMEM capacity; conservative (v7x) fallback."""
    try:
        info = pltpu.get_tpu_info()
        for name in ("vmem_capacity_bytes", "vmem_size_bytes", "vmem_bytes"):
            v = getattr(info, name, None)
            if isinstance(v, int) and v > 0:
                return v
    except Exception:
        pass
    return 64 * 1024 * 1024


def multi_head_factor_attention(x, wW, bW, wV, bV, gamma, beta,
                                *, num_heads, eps=1e-5, transpose_output=True):
    """Pallas implementation of MultiHeadFactorAttentionLayer.forward (eval).

    x:     (B, N, H)
    wW:    (H, H)   = W.weight      bW: (H,)
    wV:    (nh, H)  = V.weight      bV: (nh,)
    gamma, beta: (H,)  layer-norm affine params

    If transpose_output=False the result is returned in the lane-dense
    (B, H, N) layout (skips the final HBM transpose pass; useful when the
    consuming layer keeps that layout resident).
    """
    B, N, H = x.shape
    assert H % num_heads == 0, "hidden_dim must be divisible by num_heads"
    head_dim = H // num_heads
    # The PyTorch expression `x * weighted_x` only broadcasts when head_dim == 1.
    assert head_dim == 1 and H == num_heads, (
        "MultiHeadFactorAttentionLayer requires hidden_dim == num_heads "
        "(head_dim == 1) for the `x * weighted_x` broadcast to be valid.")

    f32 = jnp.float32
    # Single packed parameter block (one resident DMA stream):
    #   cols [0:H) W, [H:2H) V, [2H:3H) identity (for the in-kernel MXU
    #   transpose), then bW, bV, gamma, beta as columns.
    params = jnp.concatenate(
        [wW.astype(f32), wV.astype(f32), jnp.eye(H, dtype=f32),
         bW.astype(f32).reshape(H, 1), bV.astype(f32).reshape(H, 1),
         gamma.astype(f32).reshape(H, 1), beta.astype(f32).reshape(H, 1)],
        axis=1)                                            # (H, 3H+4)

    # ---- generation-aware tiling --------------------------------------
    def _r8(v):
        return _cdiv(v, 8) * 8

    def _r128(v):
        return _cdiv(v, 128) * 128

    vmem_cap = _vmem_capacity_bytes()
    # ~48 MiB scoped limit on 64-MiB v7x, 96 MiB on 128-MiB v5e/v6e.
    vmem_limit = int(min(96 * 2**20, max(32 * 2**20, (vmem_cap * 3) // 4)))

    # Per-batch-element VMEM footprint (tiled/padded layouts):
    #   input (N, H) slab pads H -> 128 lanes; output/temps are (H, N) slabs.
    in_slab = _r8(N) * 128 * 4
    out_slab = _r8(H) * _r128(N) * 4
    per_b = 2 * (in_slab + out_slab) + 6 * out_slab        # dbl-buffered I/O + temps
    budget = max(per_b, int(vmem_limit * 0.35))
    bt_max = max(1, budget // per_b)

    steps = _cdiv(B, bt_max)
    # Pipelining / megacore floor: prefer >= 4 grid steps (>= 2 per TC on
    # v7x) when the batch allows and blocks stay >= 256 KiB of real data,
    # so tiny problems on 1-TC parts are not shredded into overhead.
    while steps < min(B, 4) and _cdiv(B, steps + 1) * N * H * 4 >= (256 << 10):
        steps += 1
    Bt = _cdiv(B, steps)
    steps = _cdiv(B, Bt)
    B_pad = steps * Bt
    x_in = x if B_pad == B else jnp.pad(x, ((0, B_pad - B), (0, 0), (0, 0)))

    kernel = functools.partial(_mhfa_kernel, H=H, eps=eps)

    out_t = pl.pallas_call(
        kernel,
        out_shape=jax.ShapeDtypeStruct((B_pad, H, N), x.dtype),
        grid=(steps,),
        in_specs=[
            pl.BlockSpec((Bt, N, H), lambda i: (i, 0, 0)),          # x, natural layout
            pl.BlockSpec((H, 3 * H + 4), lambda i: (0, 0)),         # packed params
        ],
        out_specs=pl.BlockSpec((Bt, H, N), lambda i: (i, 0, 0)),    # lane-dense output
        compiler_params=pltpu.CompilerParams(
            dimension_semantics=("parallel",),
            vmem_limit_bytes=vmem_limit),
    )(x_in, params)

    out_t = out_t[:B]
    if transpose_output:
        # The one remaining layout pass; skip it via transpose_output=False
        # when the consumer accepts the (B, H, N) layout.
        return jnp.transpose(out_t, (0, 2, 1))
    return out_t


def _reference_forward(x, wW, bW, wV, bV, gamma, beta, num_heads, eps=1e-5):
    """Pure-JAX mirror of the PyTorch forward (eval mode)."""
    B, N, H = x.shape
    head_dim = H // num_heads
    u = jnp.tanh(x @ wW.T + bW)
    attn = jax.nn.softmax(u @ wV.T + bV, axis=1)
    u_split = u.reshape(B, N, num_heads, head_dim)
    attn = attn.reshape(B, N, num_heads, 1)
    weighted = (u_split * attn).sum(axis=2)                # (B, N, head_dim)
    y = x + x * weighted
    mean = y.mean(-1, keepdims=True)
    var = ((y - mean) ** 2).mean(-1, keepdims=True)
    return (y - mean) / jnp.sqrt(var + eps) * gamma + beta


if __name__ == "__main__":
    B, N = 2, 8            # batch, num_features
    num_heads = 7          # module default
    hidden_dim = 7         # hidden_dim == num_heads -> head_dim == 1 (torch broadcast)

    key = jax.random.PRNGKey(0)
    k = jax.random.split(key, 5)
    x = jax.random.normal(k[0], (B, N, hidden_dim), jnp.float32)
    wW = 0.2 * jax.random.normal(k[1], (hidden_dim, hidden_dim), jnp.float32)
    bW = 0.1 * jax.random.normal(k[2], (hidden_dim,), jnp.float32)
    wV = 0.2 * jax.random.normal(k[3], (num_heads, hidden_dim), jnp.float32)
    bV = 0.1 * jax.random.normal(k[4], (num_heads,), jnp.float32)
    gamma = jnp.ones((hidden_dim,), jnp.float32)
    beta = jnp.zeros((hidden_dim,), jnp.float32)

    out = multi_head_factor_attention(
        x, wW, bW, wV, bV, gamma, beta, num_heads=num_heads)
    out = jax.block_until_ready(out)

    ref = _reference_forward(x, wW, bW, wV, bV, gamma, beta, num_heads)
    assert out.shape == (B, N, hidden_dim)
    assert jnp.allclose(out, ref, atol=2e-3, rtol=2e-3), "mismatch vs JAX reference"

    print("KERNEL_OK")
</pallas_src>

<mosaic_0001>
module attributes {stable_mosaic.version = 11 : i64} {
  func.func @_mhfa_kernel(%arg0: i32, %arg1: memref<2x8x7xf32, #tpu.memory_space<vmem>>, %arg2: memref<7x25xf32, #tpu.memory_space<vmem>>, %arg3: memref<2x7x8xf32, #tpu.memory_space<vmem>>) attributes {dimension_semantics = [#tpu.dimension_semantics<parallel>], iteration_bounds = array<i64: 1>, scalar_prefetch = 0 : i64, scratch_operands = 0 : i64, tpu.core_type = #tpu.core_type<tc>, window_params = [{transform_indices = @transform_0, window_bounds = array<i64: 2, 8, 7>}, {pipeline_mode = #tpu.pipeline_mode<synchronous>, transform_indices = @transform_1, window_bounds = array<i64: 7, 25>}, {transform_indices = @transform_2, window_bounds = array<i64: 2, 7, 8>}]} {
    %c0 = arith.constant 0 : index
    %c0_0 = arith.constant 0 : index
    %c0_1 = arith.constant 0 : index
    %0 = vector.load %arg1[%c0, %c0_0, %c0_1] : memref<2x8x7xf32, #tpu.memory_space<vmem>>, vector<2x8x7xf32>
    %c0_2 = arith.constant 0 : index
    %c0_3 = arith.constant 0 : index
    %1 = vector.load %arg2[%c0_2, %c0_3] : memref<7x25xf32, #tpu.memory_space<vmem>>, vector<7x25xf32>
    %2 = vector.extract_strided_slice %1 {offsets = [0, 0], sizes = [7, 7], strides = [1, 1]} : vector<7x25xf32> to vector<7x7xf32>
    %3 = vector.extract_strided_slice %1 {offsets = [0, 7], sizes = [7, 7], strides = [1, 1]} : vector<7x25xf32> to vector<7x7xf32>
    %4 = vector.extract_strided_slice %1 {offsets = [0, 14], sizes = [7, 7], strides = [1, 1]} : vector<7x25xf32> to vector<7x7xf32>
    %5 = vector.extract_strided_slice %1 {offsets = [0, 21], sizes = [7, 1], strides = [1, 1]} : vector<7x25xf32> to vector<7x1xf32>
    %6 = vector.shape_cast %5 : vector<7x1xf32> to vector<1x7x1xf32>
    %7 = vector.extract_strided_slice %1 {offsets = [0, 22], sizes = [7, 1], strides = [1, 1]} : vector<7x25xf32> to vector<7x1xf32>
    %8 = vector.shape_cast %7 : vector<7x1xf32> to vector<1x7x1xf32>
    %9 = vector.extract_strided_slice %1 {offsets = [0, 23], sizes = [7, 1], strides = [1, 1]} : vector<7x25xf32> to vector<7x1xf32>
    %10 = vector.shape_cast %9 : vector<7x1xf32> to vector<1x7x1xf32>
    %11 = vector.extract_strided_slice %1 {offsets = [0, 24], sizes = [7, 1], strides = [1, 1]} : vector<7x25xf32> to vector<7x1xf32>
    %12 = vector.shape_cast %11 : vector<7x1xf32> to vector<1x7x1xf32>
    %13 = vector.shape_cast %2 : vector<7x7xf32> to vector<1x7x7xf32>
    %14 = vector.shape_cast %13 : vector<1x7x7xf32> to vector<1x7x7xf32>
    %15 = vector.broadcast %14 : vector<1x7x7xf32> to vector<2x7x7xf32>
    %16 = vector.shape_cast %3 : vector<7x7xf32> to vector<1x7x7xf32>
    %17 = vector.shape_cast %16 : vector<1x7x7xf32> to vector<1x7x7xf32>
    %18 = vector.broadcast %17 : vector<1x7x7xf32> to vector<2x7x7xf32>
    %19 = vector.shape_cast %4 : vector<7x7xf32> to vector<1x7x7xf32>
    %20 = vector.shape_cast %19 : vector<1x7x7xf32> to vector<1x7x7xf32>
    %21 = vector.broadcast %20 : vector<1x7x7xf32> to vector<2x7x7xf32>
    "tpu.trace_start"() <{level = 10 : i32, message = "bhj,bnj->bhn"}> : () -> ()
    %cst = arith.constant dense<0.000000e+00> : vector<2x7x8xf32>
    %22 = tpu.matmul %21, %0, %cst {dimension_numbers = #tpu.dot_dimension_numbers<[2], [2], [1], [1], [0, 0, 0, 1, 1, 1], [0], [0]>, precision = #tpu.contract_precision<fp32>} : vector<2x7x7xf32>, vector<2x8x7xf32>, vector<2x7x8xf32> -> vector<2x7x8xf32>
    %cst_4 = arith.constant dense<0.000000e+00> : vector<2x7x8xf32>
    %23 = tpu.matmul %15, %0, %cst_4 {dimension_numbers = #tpu.dot_dimension_numbers<[2], [2], [1], [1], [0, 0, 0, 1, 1, 1], [0], [0]>, precision = #tpu.contract_precision<fp32>} : vector<2x7x7xf32>, vector<2x8x7xf32>, vector<2x7x8xf32> -> vector<2x7x8xf32>
    "tpu.trace_stop"() : () -> ()
    %24 = vector.broadcast %6 : vector<1x7x1xf32> to vector<2x7x8xf32>
    %25 = arith.addf %23, %24 : vector<2x7x8xf32>
    %26 = math.tanh %25 : vector<2x7x8xf32>
    "tpu.trace_start"() <{level = 10 : i32, message = "bhj,bjn->bhn"}> : () -> ()
    %cst_5 = arith.constant dense<0.000000e+00> : vector<2x7x8xf32>
    %27 = tpu.matmul %18, %26, %cst_5 {dimension_numbers = #tpu.dot_dimension_numbers<[2], [1], [1], [2], [0, 0, 0, 1, 1, 2], [0], [0]>, precision = #tpu.contract_precision<fp32>} : vector<2x7x7xf32>, vector<2x7x8xf32>, vector<2x7x8xf32> -> vector<2x7x8xf32>
    "tpu.trace_stop"() : () -> ()
    %28 = vector.broadcast %8 : vector<1x7x1xf32> to vector<2x7x8xf32>
    %29 = arith.addf %27, %28 : vector<2x7x8xf32>
    %cst_6 = arith.constant dense<0xFF800000> : vector<2x7xf32>
    %30 = vector.multi_reduction <maximumf>, %29, %cst_6 [2] : vector<2x7x8xf32> to vector<2x7xf32>
    %31 = vector.shape_cast %30 : vector<2x7xf32> to vector<2x7x1xf32>
    %32 = vector.broadcast %31 : vector<2x7x1xf32> to vector<2x7x8xf32>
    %33 = arith.subf %29, %32 : vector<2x7x8xf32>
    %34 = math.exp %33 : vector<2x7x8xf32>
    %cst_7 = arith.constant dense<0.000000e+00> : vector<2x7xf32>
    %35 = vector.multi_reduction <add>, %34, %cst_7 [2] : vector<2x7x8xf32> to vector<2x7xf32>
    %36 = vector.shape_cast %35 : vector<2x7xf32> to vector<2x7x1xf32>
    %cst_8 = arith.constant 1.000000e+00 : f32
    %37 = vector.broadcast %cst_8 : f32 to vector<2x7x1xf32>
    %38 = arith.divf %37, %36 : vector<2x7x1xf32>
    %39 = vector.broadcast %38 : vector<2x7x1xf32> to vector<2x7x8xf32>
    %40 = arith.mulf %34, %39 : vector<2x7x8xf32>
    %41 = arith.mulf %26, %40 : vector<2x7x8xf32>
    %cst_9 = arith.constant dense<0.000000e+00> : vector<2x8xf32>
    %42 = vector.multi_reduction <add>, %41, %cst_9 [1] : vector<2x7x8xf32> to vector<2x8xf32>
    %43 = vector.shape_cast %42 : vector<2x8xf32> to vector<2x1x8xf32>
    %cst_10 = arith.constant 1.000000e+00 : f32
    %44 = vector.broadcast %cst_10 : f32 to vector<2x1x8xf32>
    %45 = arith.addf %44, %43 : vector<2x1x8xf32>
    %46 = vector.broadcast %45 : vector<2x1x8xf32> to vector<2x7x8xf32>
    %47 = arith.mulf %22, %46 : vector<2x7x8xf32>
    %cst_11 = arith.constant dense<0.000000e+00> : vector<2x8xf32>
    %48 = vector.multi_reduction <add>, %47, %cst_11 [1] : vector<2x7x8xf32> to vector<2x8xf32>
    %49 = vector.shape_cast %48 : vector<2x8xf32> to vector<2x1x8xf32>
    %cst_12 = arith.constant 7.000000e+00 : f32
    %50 = vector.broadcast %cst_12 : f32 to vector<2x1x8xf32>
    %51 = arith.divf %49, %50 : vector<2x1x8xf32>
    %52 = vector.broadcast %51 : vector<2x1x8xf32> to vector<2x7x8xf32>
    %53 = arith.subf %47, %52 : vector<2x7x8xf32>
    %54 = arith.mulf %53, %53 : vector<2x7x8xf32>
    %cst_13 = arith.constant dense<0.000000e+00> : vector<2x8xf32>
    %55 = vector.multi_reduction <add>, %54, %cst_13 [1] : vector<2x7x8xf32> to vector<2x8xf32>
    %56 = vector.shape_cast %55 : vector<2x8xf32> to vector<2x1x8xf32>
    %cst_14 = arith.constant 7.000000e+00 : f32
    %57 = vector.broadcast %cst_14 : f32 to vector<2x1x8xf32>
    %58 = arith.divf %56, %57 : vector<2x1x8xf32>
    %cst_15 = arith.constant 9.99999974E-6 : f32
    %59 = vector.broadcast %cst_15 : f32 to vector<2x1x8xf32>
    %60 = arith.addf %58, %59 : vector<2x1x8xf32>
    %61 = math.rsqrt %60 : vector<2x1x8xf32>
    %62 = vector.broadcast %61 : vector<2x1x8xf32> to vector<2x7x8xf32>
    %63 = arith.mulf %53, %62 : vector<2x7x8xf32>
    %64 = vector.broadcast %10 : vector<1x7x1xf32> to vector<2x7x8xf32>
    %65 = arith.mulf %63, %64 : vector<2x7x8xf32>
    %66 = vector.broadcast %12 : vector<1x7x1xf32> to vector<2x7x8xf32>
    %67 = arith.addf %65, %66 : vector<2x7x8xf32>
    %c0_16 = arith.constant 0 : index
    %c0_17 = arith.constant 0 : index
    %c0_18 = arith.constant 0 : index
    %68 = vector.load %arg3[%c0_16, %c0_17, %c0_18] : memref<2x7x8xf32, #tpu.memory_space<vmem>>, vector<2x7x8xf32>
    tpu.vector_store %arg3[%c0_16, %c0_17, %c0_18], %67 {strides = array<i32>} : memref<2x7x8xf32, #tpu.memory_space<vmem>>, vector<2x7x8xf32>,
    return
  }
  func.func @transform_0(%arg0: i32) -> (i32, i32, i32) {
    %c0_i32 = arith.constant 0 : i32
    %c0_i32_0 = arith.constant 0 : i32
    %c0_i32_1 = arith.constant 0 : i32
    return %arg0, %c0_i32, %c0_i32_0 : i32, i32, i32
  }
  func.func @transform_1(%arg0: i32) -> (i32, i32) {
    %c0_i32 = arith.constant 0 : i32
    %c0_i32_0 = arith.constant 0 : i32
    %c0_i32_1 = arith.constant 0 : i32
    return %c0_i32, %c0_i32_0 : i32, i32
  }
  func.func @transform_2(%arg0: i32) -> (i32, i32, i32) {
    %c0_i32 = arith.constant 0 : i32
    %c0_i32_0 = arith.constant 0 : i32
    %c0_i32_1 = arith.constant 0 : i32
    return %arg0, %c0_i32, %c0_i32_0 : i32, i32, i32
  }
}

</mosaic_0001>

<llo_original>
// kernel: tpu_custom_call.1
$region0: #{tpu_custom_call.1}
  #allocation0 [shape = 'u32[]', space=smem, size = 0x4, offset = 0x4, fixed_abs, tag = 'smem constant byte address 0x4 - core index']
  #allocation1 [shape = 'u32[144,128]{1,0:T(1,128)}', space=vmem, size = 0x12000, scoped, tag = 'internal scratch']
  %s0 = inlined_call_operand.vmem [shape: f32[2,8,7], index: 0, kind: input, shape index: {}]
  %s1 = inlined_call_operand.vmem [shape: f32[7,25], index: 1, kind: input, shape index: {}]
  %s2 = inlined_call_operand.vmem [shape: f32[2,7,8], index: 2, kind: output, shape index: {}]
  %s3 = sld [smem:[#allocation0]]
  $region18: #{tpu_custom_call.1} parent=0
    _
  %s5 = ssub.s32 1, %s3
  %s6 = scalar_select 0, %s5, %s3
  // Predicated region
  $region2: #{tpu_custom_call.1} parent=0 // pred_check
    _
  $region3: #{tpu_custom_call.1} parent=0 // pred_check_branch
    %8 = sbr.rel (0) target = $region5
  $region4: #{tpu_custom_call.1} parent=0 // pred_region
    _
  $region5: #{tpu_custom_call.1} parent=0 // pred_fallthru
    _
  // Predicated region
  $region6: #{tpu_custom_call.1} parent=0 // pred_check
    _
  $region7: #{tpu_custom_call.1} parent=0 // pred_check_branch
    %10 = sbr.rel (0) target = $region9
  $region8: #{tpu_custom_call.1} parent=0 // pred_region
    _
  $region9: #{tpu_custom_call.1} parent=0 // pred_fallthru
    _
  %v11 = vld [vmem:[%s0] sm:$0xff]
  %v12 = vld [vmem:[%s0 + $0x8] sm:$0xff]
  %v13 = vld [vmem:[%s1] sm:$0x7f]
  %15 = vrot.lane.b32.xlu0 %v13, 114
  %v16 = vpop.permute.xlu0 %15
  %vm17 = vcmask 56320
  %v18 = vsel %vm17, %v16, 0
  %v21 = vsel %vm17, %v11, 0
  %23 = vmatprep.subr.mxu0 0.0
  %24 = vmatpush1.xpose.msra.mxu0 0.0
  %25 = vmatprep.subr.mxu0 0.0
  %26 = vmatpush1.xpose.msra.mxu0 0.0
  %27 = vmatprep.subr.mxu0 0.0
  %28 = vmatpush1.xpose.msra.mxu0 0.0
  %29 = vmatprep.subr.mxu0 0.0
  %30 = vmatpush1.xpose.msra.mxu0 0.0
  %31 = vmatprep.subr.mxu0 0.0
  %32 = vmatpush1.xpose.msra.mxu0 0.0
  %33 = vmatprep.subr.mxu0 0.0
  %34 = vmatpush1.xpose.msra.mxu0 0.0
  %35 = vmatprep.subr.mxu0 0.0
  %36 = vmatpush1.xpose.msra.mxu0 0.0
  %37 = vmatprep.subr.mxu0 0.0
  %38 = vmatpush1.xpose.msra.mxu0 0.0
  %39 = vmatprep.subr.mxu0 0.0
  %40 = vmatpush1.xpose.msra.mxu0 0.0
  %41 = vmatprep.subr.mxu0 0.0
  %42 = vmatpush1.xpose.msra.mxu0 0.0
  %43 = vmatprep.subr.mxu0 0.0
  %44 = vmatpush1.xpose.msra.mxu0 0.0
  %45 = vmatprep.subr.mxu0 0.0
  %46 = vmatpush1.xpose.msra.mxu0 0.0
  %47 = vmatprep.subr.mxu0 0.0
  %48 = vmatpush1.xpose.msra.mxu0 0.0
  %49 = vmatprep.subr.mxu0 0.0
  %50 = vmatpush1.xpose.msra.mxu0 0.0
  %51 = vmatprep.subr.mxu0 0.0
  %52 = vmatpush1.xpose.msra.mxu0 0.0
  %53 = vmatprep.subr.mxu0 0.0
  %v54 = vand.u32 %v21, 4294901760
  %55 = vmatpush1.xpose.msra.mxu0 %v54
  %56 = vmatprep.subr.mxu0 0.0
  %57 = vmatpush2.xpose.msra.mxu0 0.0
  %58 = vmatprep.subr.mxu0 0.0
  %59 = vmatpush2.xpose.msra.mxu0 0.0
  %60 = vmatprep.subr.mxu0 0.0
  %61 = vmatpush2.xpose.msra.mxu0 0.0
  %62 = vmatprep.subr.mxu0 0.0
  %63 = vmatpush2.xpose.msra.mxu0 0.0
  %64 = vmatprep.subr.mxu0 0.0
  %65 = vmatpush2.xpose.msra.mxu0 0.0
  %66 = vmatprep.subr.mxu0 0.0
  %67 = vmatpush2.xpose.msra.mxu0 0.0
  %68 = vmatprep.subr.mxu0 0.0
  %69 = vmatpush2.xpose.msra.mxu0 0.0
  %70 = vmatprep.subr.mxu0 0.0
  %71 = vmatpush2.xpose.msra.mxu0 0.0
  %72 = vmatprep.subr.mxu0 0.0
  %73 = vmatpush2.xpose.msra.mxu0 0.0
  %74 = vmatprep.subr.mxu0 0.0
  %75 = vmatpush2.xpose.msra.mxu0 0.0
  %76 = vmatprep.subr.mxu0 0.0
  %77 = vmatpush2.xpose.msra.mxu0 0.0
  %78 = vmatprep.subr.mxu0 0.0
  %79 = vmatpush2.xpose.msra.mxu0 0.0
  %80 = vmatprep.subr.mxu0 0.0
  %81 = vmatpush2.xpose.msra.mxu0 0.0
  %82 = vmatprep.subr.mxu0 0.0
  %83 = vmatpush2.xpose.msra.mxu0 0.0
  %84 = vmatprep.subr.mxu0 0.0
  %85 = vmatpush2.xpose.msra.mxu0 0.0
  %86 = vmatprep.subr.mxu0 0.0
  %87 = vmatpush2.xpose.msra.mxu0 0.0
  %88 = vmatprep.mubr.f32.mxu0 0.0
  %v89 = vand.u32 %v18, 4294901760
  %v90 = vsub.f32 %v18, %v89
  %v91 = vand.u32 %v90, 4294901760
  %v92 = vsub.f32 %v90, %v91
  %v93 = vand.u32 %v92, 4294901760
  %94 = vmatmul.mubr.f32.gmra.mxu0 %v93
  %v95 = vpop.f32.mrf.mxu0
  %v96 = vadd.f32 0.0, %v95
  %v97 = vpop.f32.mrf.mxu0
  %98 = vdwg.mxu0
  %99 = vmatprep.subr.mxu0 0.0
  %100 = vmatpush1.xpose.msra.mxu0 0.0
  %101 = vmatprep.subr.mxu0 0.0
  %102 = vmatpush1.xpose.msra.mxu0 0.0
  %103 = vmatprep.subr.mxu0 0.0
  %104 = vmatpush1.xpose.msra.mxu0 0.0
  %105 = vmatprep.subr.mxu0 0.0
  %106 = vmatpush1.xpose.msra.mxu0 0.0
  %107 = vmatprep.subr.mxu0 0.0
  %108 = vmatpush1.xpose.msra.mxu0 0.0
  %109 = vmatprep.subr.mxu0 0.0
  %110 = vmatpush1.xpose.msra.mxu0 0.0
  %111 = vmatprep.subr.mxu0 0.0
  %112 = vmatpush1.xpose.msra.mxu0 0.0
  %113 = vmatprep.subr.mxu0 0.0
  %114 = vmatpush1.xpose.msra.mxu0 0.0
  %115 = vmatprep.subr.mxu0 0.0
  %116 = vmatpush1.xpose.msra.mxu0 0.0
  %117 = vmatprep.subr.mxu0 0.0
  %118 = vmatpush1.xpose.msra.mxu0 0.0
  %119 = vmatprep.subr.mxu0 0.0
  %120 = vmatpush1.xpose.msra.mxu0 0.0
  %121 = vmatprep.subr.mxu0 0.0
  %122 = vmatpush1.xpose.msra.mxu0 0.0
  %123 = vmatprep.subr.mxu0 0.0
  %124 = vmatpush1.xpose.msra.mxu0 0.0
  %125 = vmatprep.subr.mxu0 0.0
  %126 = vmatpush1.xpose.msra.mxu0 0.0
  %127 = vmatprep.subr.mxu0 0.0
  %128 = vmatpush1.xpose.msra.mxu0 0.0
  %129 = vmatprep.subr.mxu0 0.0
  %v130 = vand.u32 %v21, 4294901760
  %v131 = vsub.f32 %v21, %v130
  %v132 = vand.u32 %v131, 4294901760
  %v133 = vsub.f32 %v131, %v132
  %v134 = vand.u32 %v133, 4294901760
  %135 = vmatpush1.xpose.msra.mxu0 %v134
  %136 = vmatprep.subr.mxu0 0.0
  %137 = vmatpush2.xpose.msra.mxu0 0.0
  %138 = vmatprep.subr.mxu0 0.0
  %139 = vmatpush2.xpose.msra.mxu0 0.0
  %140 = vmatprep.subr.mxu0 0.0
  %141 = vmatpush2.xpose.msra.mxu0 0.0
  %142 = vmatprep.subr.mxu0 0.0
  %143 = vmatpush2.xpose.msra.mxu0 0.0
  %144 = vmatprep.subr.mxu0 0.0
  %145 = vmatpush2.xpose.msra.mxu0 0.0
  %146 = vmatprep.subr.mxu0 0.0
  %147 = vmatpush2.xpose.msra.mxu0 0.0
  %148 = vmatprep.subr.mxu0 0.0
  %149 = vmatpush2.xpose.msra.mxu0 0.0
  %150 = vmatprep.subr.mxu0 0.0
  %151 = vmatpush2.xpose.msra.mxu0 0.0
  %152 = vmatprep.subr.mxu0 0.0
  %153 = vmatpush2.xpose.msra.mxu0 0.0
  %154 = vmatprep.subr.mxu0 0.0
  %155 = vmatpush2.xpose.msra.mxu0 0.0
  %156 = vmatprep.subr.mxu0 0.0
  %157 = vmatpush2.xpose.msra.mxu0 0.0
  %158 = vmatprep.subr.mxu0 0.0
  %159 = vmatpush2.xpose.msra.mxu0 0.0
  %160 = vmatprep.subr.mxu0 0.0
  %161 = vmatpush2.xpose.msra.mxu0 0.0
  %162 = vmatprep.subr.mxu0 0.0
  %163 = vmatpush2.xpose.msra.mxu0 0.0
  %164 = vmatprep.subr.mxu0 0.0
  %165 = vmatpush2.xpose.msra.mxu0 0.0
  %166 = vmatprep.subr.mxu0 0.0
  %167 = vmatpush2.xpose.msra.mxu0 0.0
  %168 = vmatprep.mubr.f32.mxu0 0.0
  %v169 = vand.u32 %v18, 4294901760
  %170 = vmatmul.mubr.f32.gmra.mxu0 %v169
  %v171 = vpop.f32.mrf.mxu0
  %v172 = vadd.f32 %v96, %v171
  %v173 = vpop.f32.mrf.mxu0
  %174 = vdwg.mxu0
  %175 = vmatprep.subr.mxu0 0.0
  %176 = vmatpush1.xpose.msra.mxu0 0.0
  %177 = vmatprep.subr.mxu0 0.0
  %178 = vmatpush1.xpose.msra.mxu0 0.0
  %179 = vmatprep.subr.mxu0 0.0
  %180 = vmatpush1.xpose.msra.mxu0 0.0
  %181 = vmatprep.subr.mxu0 0.0
  %182 = vmatpush1.xpose.msra.mxu0 0.0
  %183 = vmatprep.subr.mxu0 0.0
  %184 = vmatpush1.xpose.msra.mxu0 0.0
  %185 = vmatprep.subr.mxu0 0.0
  %186 = vmatpush1.xpose.msra.mxu0 0.0
  %187 = vmatprep.subr.mxu0 0.0
  %188 = vmatpush1.xpose.msra.mxu0 0.0
  %189 = vmatprep.subr.mxu0 0.0
  %190 = vmatpush1.xpose.msra.mxu0 0.0
  %191 = vmatprep.subr.mxu0 0.0
  %192 = vmatpush1.xpose.msra.mxu0 0.0
  %193 = vmatprep.subr.mxu0 0.0
  %194 = vmatpush1.xpose.msra.mxu0 0.0
  %195 = vmatprep.subr.mxu0 0.0
  %196 = vmatpush1.xpose.msra.mxu0 0.0
  %197 = vmatprep.subr.mxu0 0.0
  %198 = vmatpush1.xpose.msra.mxu0 0.0
  %199 = vmatprep.subr.mxu0 0.0
  %200 = vmatpush1.xpose.msra.mxu0 0.0
  %201 = vmatprep.subr.mxu0 0.0
  %202 = vmatpush1.xpose.msra.mxu0 0.0
  %203 = vmatprep.subr.mxu0 0.0
  %204 = vmatpush1.xpose.msra.mxu0 0.0
  %205 = vmatprep.subr.mxu0 0.0
  %v206 = vand.u32 %v21, 4294901760
  %v207 = vsub.f32 %v21, %v206
  %208 = vmatpush1.xpose.msra.mxu0 %v207
  %209 = vmatprep.subr.mxu0 0.0
  %210 = vmatpush2.xpose.msra.mxu0 0.0
  %211 = vmatprep.subr.mxu0 0.0
  %212 = vmatpush2.xpose.msra.mxu0 0.0
  %213 = vmatprep.subr.mxu0 0.0
  %214 = vmatpush2.xpose.msra.mxu0 0.0
  %215 = vmatprep.subr.mxu0 0.0
  %216 = vmatpush2.xpose.msra.mxu0 0.0
  %217 = vmatprep.subr.mxu0 0.0
  %218 = vmatpush2.xpose.msra.mxu0 0.0
  %219 = vmatprep.subr.mxu0 0.0
  %220 = vmatpush2.xpose.msra.mxu0 0.0
  %221 = vmatprep.subr.mxu0 0.0
  %222 = vmatpush2.xpose.msra.mxu0 0.0
  %223 = vmatprep.subr.mxu0 0.0
  %224 = vmatpush2.xpose.msra.mxu0 0.0
  %225 = vmatprep.subr.mxu0 0.0
  %226 = vmatpush2.xpose.msra.mxu0 0.0
  %227 = vmatprep.subr.mxu0 0.0
  %228 = vmatpush2.xpose.msra.mxu0 0.0
  %229 = vmatprep.subr.mxu0 0.0
  %230 = vmatpush2.xpose.msra.mxu0 0.0
  %231 = vmatprep.subr.mxu0 0.0
  %232 = vmatpush2.xpose.msra.mxu0 0.0
  %233 = vmatprep.subr.mxu0 0.0
  %234 = vmatpush2.xpose.msra.mxu0 0.0
  %235 = vmatprep.subr.mxu0 0.0
  %236 = vmatpush2.xpose.msra.mxu0 0.0
  %237 = vmatprep.subr.mxu0 0.0
  %238 = vmatpush2.xpose.msra.mxu0 0.0
  %239 = vmatprep.subr.mxu0 0.0
  %240 = vmatpush2.xpose.msra.mxu0 0.0
  %241 = vmatprep.mubr.f32.mxu0 0.0
  %v242 = vand.u32 %v18, 4294901760
  %v243 = vsub.f32 %v18, %v242
  %244 = vmatmul.mubr.f32.gmra.mxu0 %v243
  %v245 = vpop.f32.mrf.mxu0
  %v246 = vadd.f32 %v172, %v245
  %v247 = vpop.f32.mrf.mxu0
  %248 = vdwg.mxu0
  %249 = vmatprep.subr.mxu0 0.0
  %250 = vmatpush1.xpose.msra.mxu0 0.0
  %251 = vmatprep.subr.mxu0 0.0
  %252 = vmatpush1.xpose.msra.mxu0 0.0
  %253 = vmatprep.subr.mxu0 0.0
  %254 = vmatpush1.xpose.msra.mxu0 0.0
  %255 = vmatprep.subr.mxu0 0.0
  %256 = vmatpush1.xpose.msra.mxu0 0.0
  %257 = vmatprep.subr.mxu0 0.0
  %258 = vmatpush1.xpose.msra.mxu0 0.0
  %259 = vmatprep.subr.mxu0 0.0
  %260 = vmatpush1.xpose.msra.mxu0 0.0
  %261 = vmatprep.subr.mxu0 0.0
  %262 = vmatpush1.xpose.msra.mxu0 0.0
  %263 = vmatprep.subr.mxu0 0.0
  %264 = vmatpush1.xpose.msra.mxu0 0.0
  %265 = vmatprep.subr.mxu0 0.0
  %266 = vmatpush1.xpose.msra.mxu0 0.0
  %267 = vmatprep.subr.mxu0 0.0
  %268 = vmatpush1.xpose.msra.mxu0 0.0
  %269 = vmatprep.subr.mxu0 0.0
  %270 = vmatpush1.xpose.msra.mxu0 0.0
  %271 = vmatprep.subr.mxu0 0.0
  %272 = vmatpush1.xpose.msra.mxu0 0.0
  %273 = vmatprep.subr.mxu0 0.0
  %274 = vmatpush1.xpose.msra.mxu0 0.0
  %275 = vmatprep.subr.mxu0 0.0
  %276 = vmatpush1.xpose.msra.mxu0 0.0
  %277 = vmatprep.subr.mxu0 0.0
  %278 = vmatpush1.xpose.msra.mxu0 0.0
  %279 = vmatprep.subr.mxu0 0.0
  %v280 = vand.u32 %v21, 4294901760
  %281 = vmatpush1.xpose.msra.mxu0 %v280
  %282 = vmatprep.subr.mxu0 0.0
  %283 = vmatpush2.xpose.msra.mxu0 0.0
  %284 = vmatprep.subr.mxu0 0.0
  %285 = vmatpush2.xpose.msra.mxu0 0.0
  %286 = vmatprep.subr.mxu0 0.0
  %287 = vmatpush2.xpose.msra.mxu0 0.0
  %288 = vmatprep.subr.mxu0 0.0
  %289 = vmatpush2.xpose.msra.mxu0 0.0
  %290 = vmatprep.subr.mxu0 0.0
  %291 = vmatpush2.xpose.msra.mxu0 0.0
  %292 = vmatprep.subr.mxu0 0.0
  %293 = vmatpush2.xpose.msra.mxu0 0.0
  %294 = vmatprep.subr.mxu0 0.0
  %295 = vmatpush2.xpose.msra.mxu0 0.0
  %296 = vmatprep.subr.mxu0 0.0
  %297 = vmatpush2.xpose.msra.mxu0 0.0
  %298 = vmatprep.subr.mxu0 0.0
  %299 = vmatpush2.xpose.msra.mxu0 0.0
  %300 = vmatprep.subr.mxu0 0.0
  %301 = vmatpush2.xpose.msra.mxu0 0.0
  %302 = vmatprep.subr.mxu0 0.0
  %303 = vmatpush2.xpose.msra.mxu0 0.0
  %304 = vmatprep.subr.mxu0 0.0
  %305 = vmatpush2.xpose.msra.mxu0 0.0
  %306 = vmatprep.subr.mxu0 0.0
  %307 = vmatpush2.xpose.msra.mxu0 0.0
  %308 = vmatprep.subr.mxu0 0.0
  %309 = vmatpush2.xpose.msra.mxu0 0.0
  %310 = vmatprep.subr.mxu0 0.0
  %311 = vmatpush2.xpose.msra.mxu0 0.0
  %312 = vmatprep.subr.mxu0 0.0
  %313 = vmatpush2.xpose.msra.mxu0 0.0
  %314 = vmatprep.mubr.f32.mxu0 0.0
  %v315 = vand.u32 %v18, 4294901760
  %v316 = vsub.f32 %v18, %v315
  %v317 = vand.u32 %v316, 4294901760
  %318 = vmatmul.mubr.f32.gmra.mxu0 %v317
  %v319 = vpop.f32.mrf.mxu0
  %v320 = vadd.f32 %v246, %v319
  %v321 = vpop.f32.mrf.mxu0
  %322 = vdwg.mxu0
  %323 = vmatprep.subr.mxu0 0.0
  %324 = vmatpush1.xpose.msra.mxu0 0.0
  %325 = vmatprep.subr.mxu0 0.0
  %326 = vmatpush1.xpose.msra.mxu0 0.0
  %327 = vmatprep.subr.mxu0 0.0
  %328 = vmatpush1.xpose.msra.mxu0 0.0
  %329 = vmatprep.subr.mxu0 0.0
  %330 = vmatpush1.xpose.msra.mxu0 0.0
  %331 = vmatprep.subr.mxu0 0.0
  %332 = vmatpush1.xpose.msra.mxu0 0.0
  %333 = vmatprep.subr.mxu0 0.0
  %334 = vmatpush1.xpose.msra.mxu0 0.0
  %335 = vmatprep.subr.mxu0 0.0
  %336 = vmatpush1.xpose.msra.mxu0 0.0
  %337 = vmatprep.subr.mxu0 0.0
  %338 = vmatpush1.xpose.msra.mxu0 0.0
  %339 = vmatprep.subr.mxu0 0.0
  %340 = vmatpush1.xpose.msra.mxu0 0.0
  %341 = vmatprep.subr.mxu0 0.0
  %342 = vmatpush1.xpose.msra.mxu0 0.0
  %343 = vmatprep.subr.mxu0 0.0
  %344 = vmatpush1.xpose.msra.mxu0 0.0
  %345 = vmatprep.subr.mxu0 0.0
  %346 = vmatpush1.xpose.msra.mxu0 0.0
  %347 = vmatprep.subr.mxu0 0.0
  %348 = vmatpush1.xpose.msra.mxu0 0.0
  %349 = vmatprep.subr.mxu0 0.0
  %350 = vmatpush1.xpose.msra.mxu0 0.0
  %351 = vmatprep.subr.mxu0 0.0
  %352 = vmatpush1.xpose.msra.mxu0 0.0
  %353 = vmatprep.subr.mxu0 0.0
  %v354 = vand.u32 %v21, 4294901760
  %v355 = vsub.f32 %v21, %v354
  %v356 = vand.u32 %v355, 4294901760
  %357 = vmatpush1.xpose.msra.mxu0 %v356
  %358 = vmatprep.subr.mxu0 0.0
  %359 = vmatpush2.xpose.msra.mxu0 0.0
  %360 = vmatprep.subr.mxu0 0.0
  %361 = vmatpush2.xpose.msra.mxu0 0.0
  %362 = vmatprep.subr.mxu0 0.0
  %363 = vmatpush2.xpose.msra.mxu0 0.0
  %364 = vmatprep.subr.mxu0 0.0
  %365 = vmatpush2.xpose.msra.mxu0 0.0
  %366 = vmatprep.subr.mxu0 0.0
  %367 = vmatpush2.xpose.msra.mxu0 0.0
  %368 = vmatprep.subr.mxu0 0.0
  %369 = vmatpush2.xpose.msra.mxu0 0.0
  %370 = vmatprep.subr.mxu0 0.0
  %371 = vmatpush2.xpose.msra.mxu0 0.0
  %372 = vmatprep.subr.mxu0 0.0
  %373 = vmatpush2.xpose.msra.mxu0 0.0
  %374 = vmatprep.subr.mxu0 0.0
  %375 = vmatpush2.xpose.msra.mxu0 0.0
  %376 = vmatprep.subr.mxu0 0.0
  %377 = vmatpush2.xpose.msra.mxu0 0.0
  %378 = vmatprep.subr.mxu0 0.0
  %379 = vmatpush2.xpose.msra.mxu0 0.0
  %380 = vmatprep.subr.mxu0 0.0
  %381 = vmatpush2.xpose.msra.mxu0 0.0
  %382 = vmatprep.subr.mxu0 0.0
  %383 = vmatpush2.xpose.msra.mxu0 0.0
  %384 = vmatprep.subr.mxu0 0.0
  %385 = vmatpush2.xpose.msra.mxu0 0.0
  %386 = vmatprep.subr.mxu0 0.0
  %387 = vmatpush2.xpose.msra.mxu0 0.0
  %388 = vmatprep.subr.mxu0 0.0
  %389 = vmatpush2.xpose.msra.mxu0 0.0
  %390 = vmatprep.mubr.f32.mxu0 0.0
  %v391 = vand.u32 %v18, 4294901760
  %392 = vmatmul.mubr.f32.gmra.mxu0 %v391
  %v393 = vpop.f32.mrf.mxu0
  %v394 = vadd.f32 %v320, %v393
  %v395 = vpop.f32.mrf.mxu0
  %396 = vdwg.mxu0
  %397 = vmatprep.subr.mxu0 0.0
  %398 = vmatpush1.xpose.msra.mxu0 0.0
  %399 = vmatprep.subr.mxu0 0.0
  %400 = vmatpush1.xpose.msra.mxu0 0.0
  %401 = vmatprep.subr.mxu0 0.0
  %402 = vmatpush1.xpose.msra.mxu0 0.0
  %403 = vmatprep.subr.mxu0 0.0
  %404 = vmatpush1.xpose.msra.mxu0 0.0
  %405 = vmatprep.subr.mxu0 0.0
  %406 = vmatpush1.xpose.msra.mxu0 0.0
  %407 = vmatprep.subr.mxu0 0.0
  %408 = vmatpush1.xpose.msra.mxu0 0.0
  %409 = vmatprep.subr.mxu0 0.0
  %410 = vmatpush1.xpose.msra.mxu0 0.0
  %411 = vmatprep.subr.mxu0 0.0
  %412 = vmatpush1.xpose.msra.mxu0 0.0
  %413 = vmatprep.subr.mxu0 0.0
  %414 = vmatpush1.xpose.msra.mxu0 0.0
  %415 = vmatprep.subr.mxu0 0.0
  %416 = vmatpush1.xpose.msra.mxu0 0.0
  %417 = vmatprep.subr.mxu0 0.0
  %418 = vmatpush1.xpose.msra.mxu0 0.0
  %419 = vmatprep.subr.mxu0 0.0
  %420 = vmatpush1.xpose.msra.mxu0 0.0
  %421 = vmatprep.subr.mxu0 0.0
  %422 = vmatpush1.xpose.msra.mxu0 0.0
  %423 = vmatprep.subr.mxu0 0.0
  %424 = vmatpush1.xpose.msra.mxu0 0.0
  %425 = vmatprep.subr.mxu0 0.0
  %426 = vmatpush1.xpose.msra.mxu0 0.0
  %427 = vmatprep.subr.mxu0 0.0
  %v428 = vand.u32 %v21, 4294901760
  %429 = vmatpush1.xpose.msra.mxu0 %v428
  %430 = vmatprep.subr.mxu0 0.0
  %431 = vmatpush2.xpose.msra.mxu0 0.0
  %432 = vmatprep.subr.mxu0 0.0
  %433 = vmatpush2.xpose.msra.mxu0 0.0
  %434 = vmatprep.subr.mxu0 0.0
  %435 = vmatpush2.xpose.msra.mxu0 0.0
  %436 = vmatprep.subr.mxu0 0.0
  %437 = vmatpush2.xpose.msra.mxu0 0.0
  %438 = vmatprep.subr.mxu0 0.0
  %439 = vmatpush2.xpose.msra.mxu0 0.0
  %440 = vmatprep.subr.mxu0 0.0
  %441 = vmatpush2.xpose.msra.mxu0 0.0
  %442 = vmatprep.subr.mxu0 0.0
  %443 = vmatpush2.xpose.msra.mxu0 0.0
  %444 = vmatprep.subr.mxu0 0.0
  %445 = vmatpush2.xpose.msra.mxu0 0.0
  %446 = vmatprep.subr.mxu0 0.0
  %447 = vmatpush2.xpose.msra.mxu0 0.0
  %448 = vmatprep.subr.mxu0 0.0
  %449 = vmatpush2.xpose.msra.mxu0 0.0
  %450 = vmatprep.subr.mxu0 0.0
  %451 = vmatpush2.xpose.msra.mxu0 0.0
  %452 = vmatprep.subr.mxu0 0.0
  %453 = vmatpush2.xpose.msra.mxu0 0.0
  %454 = vmatprep.subr.mxu0 0.0
  %455 = vmatpush2.xpose.msra.mxu0 0.0
  %456 = vmatprep.subr.mxu0 0.0
  %457 = vmatpush2.xpose.msra.mxu0 0.0
  %458 = vmatprep.subr.mxu0 0.0
  %459 = vmatpush2.xpose.msra.mxu0 0.0
  %460 = vmatprep.subr.mxu0 0.0
  %461 = vmatpush2.xpose.msra.mxu0 0.0
  %462 = vmatprep.mubr.f32.mxu0 0.0
  %v463 = vand.u32 %v18, 4294901760
  %464 = vmatmul.mubr.f32.gmra.mxu0 %v463
  %v465 = vpop.f32.mrf.mxu0
  %v466 = vadd.f32 %v394, %v465
  %v467 = vpop.f32.mrf.mxu0
  %468 = vdwg.mxu0
  %v470 = vsel %vm17, %v12, 0
  %472 = vmatprep.subr.mxu0 0.0
  %473 = vmatpush1.xpose.msra.mxu0 0.0
  %474 = vmatprep.subr.mxu0 0.0
  %475 = vmatpush1.xpose.msra.mxu0 0.0
  %476 = vmatprep.subr.mxu0 0.0
  %477 = vmatpush1.xpose.msra.mxu0 0.0
  %478 = vmatprep.subr.mxu0 0.0
  %479 = vmatpush1.xpose.msra.mxu0 0.0
  %480 = vmatprep.subr.mxu0 0.0
  %481 = vmatpush1.xpose.msra.mxu0 0.0
  %482 = vmatprep.subr.mxu0 0.0
  %483 = vmatpush1.xpose.msra.mxu0 0.0
  %484 = vmatprep.subr.mxu0 0.0
  %485 = vmatpush1.xpose.msra.mxu0 0.0
  %486 = vmatprep.subr.mxu0 0.0
  %487 = vmatpush1.xpose.msra.mxu0 0.0
  %488 = vmatprep.subr.mxu0 0.0
  %489 = vmatpush1.xpose.msra.mxu0 0.0
  %490 = vmatprep.subr.mxu0 0.0
  %491 = vmatpush1.xpose.msra.mxu0 0.0
  %492 = vmatprep.subr.mxu0 0.0
  %493 = vmatpush1.xpose.msra.mxu0 0.0
  %494 = vmatprep.subr.mxu0 0.0
  %495 = vmatpush1.xpose.msra.mxu0 0.0
  %496 = vmatprep.subr.mxu0 0.0
  %497 = vmatpush1.xpose.msra.mxu0 0.0
  %498 = vmatprep.subr.mxu0 0.0
  %499 = vmatpush1.xpose.msra.mxu0 0.0
  %500 = vmatprep.subr.mxu0 0.0
  %501 = vmatpush1.xpose.msra.mxu0 0.0
  %502 = vmatprep.subr.mxu0 0.0
  %v503 = vand.u32 %v470, 4294901760
  %504 = vmatpush1.xpose.msra.mxu0 %v503
  %505 = vmatprep.subr.mxu0 0.0
  %506 = vmatpush2.xpose.msra.mxu0 0.0
  %507 = vmatprep.subr.mxu0 0.0
  %508 = vmatpush2.xpose.msra.mxu0 0.0
  %509 = vmatprep.subr.mxu0 0.0
  %510 = vmatpush2.xpose.msra.mxu0 0.0
  %511 = vmatprep.subr.mxu0 0.0
  %512 = vmatpush2.xpose.msra.mxu0 0.0
  %513 = vmatprep.subr.mxu0 0.0
  %514 = vmatpush2.xpose.msra.mxu0 0.0
  %515 = vmatprep.subr.mxu0 0.0
  %516 = vmatpush2.xpose.msra.mxu0 0.0
  %517 = vmatprep.subr.mxu0 0.0
  %518 = vmatpush2.xpose.msra.mxu0 0.0
  %519 = vmatprep.subr.mxu0 0.0
  %520 = vmatpush2.xpose.msra.mxu0 0.0
  %521 = vmatprep.subr.mxu0 0.0
  %522 = vmatpush2.xpose.msra.mxu0 0.0
  %523 = vmatprep.subr.mxu0 0.0
  %524 = vmatpush2.xpose.msra.mxu0 0.0
  %525 = vmatprep.subr.mxu0 0.0
  %526 = vmatpush2.xpose.msra.mxu0 0.0
  %527 = vmatprep.subr.mxu0 0.0
  %528 = vmatpush2.xpose.msra.mxu0 0.0
  %529 = vmatprep.subr.mxu0 0.0
  %530 = vmatpush2.xpose.msra.mxu0 0.0
  %531 = vmatprep.subr.mxu0 0.0
  %532 = vmatpush2.xpose.msra.mxu0 0.0
  %533 = vmatprep.subr.mxu0 0.0
  %534 = vmatpush2.xpose.msra.mxu0 0.0
  %535 = vmatprep.subr.mxu0 0.0
  %536 = vmatpush2.xpose.msra.mxu0 0.0
  %537 = vmatprep.mubr.f32.mxu0 0.0
  %v538 = vand.u32 %v18, 4294901760
  %v539 = vsub.f32 %v18, %v538
  %v540 = vand.u32 %v539, 4294901760
  %v541 = vsub.f32 %v539, %v540
  %v542 = vand.u32 %v541, 4294901760
  %543 = vmatmul.mubr.f32.gmra.mxu0 %v542
  %v544 = vpop.f32.mrf.mxu0
  %v545 = vadd.f32 0.0, %v544
  %v546 = vpop.f32.mrf.mxu0
  %547 = vdwg.mxu0
  %548 = vmatprep.subr.mxu0 0.0
  %549 = vmatpush1.xpose.msra.mxu0 0.0
  %550 = vmatprep.subr.mxu0 0.0
  %551 = vmatpush1.xpose.msra.mxu0 0.0
  %552 = vmatprep.subr.mxu0 0.0
  %553 = vmatpush1.xpose.msra.mxu0 0.0
  %554 = vmatprep.subr.mxu0 0.0
  %555 = vmatpush1.xpose.msra.mxu0 0.0
  %556 = vmatprep.subr.mxu0 0.0
  %557 = vmatpush1.xpose.msra.mxu0 0.0
  %558 = vmatprep.subr.mxu0 0.0
  %559 = vmatpush1.xpose.msra.mxu0 0.0
  %560 = vmatprep.subr.mxu0 0.0
  %561 = vmatpush1.xpose.msra.mxu0 0.0
  %562 = vmatprep.subr.mxu0 0.0
  %563 = vmatpush1.xpose.msra.mxu0 0.0
  %564 = vmatprep.subr.mxu0 0.0
  %565 = vmatpush1.xpose.msra.mxu0 0.0
  %566 = vmatprep.subr.mxu0 0.0
  %567 = vmatpush1.xpose.msra.mxu0 0.0
  %568 = vmatprep.subr.mxu0 0.0
  %569 = vmatpush1.xpose.msra.mxu0 0.0
  %570 = vmatprep.subr.mxu0 0.0
  %571 = vmatpush1.xpose.msra.mxu0 0.0
  %572 = vmatprep.subr.mxu0 0.0
  %573 = vmatpush1.xpose.msra.mxu0 0.0
  %574 = vmatprep.subr.mxu0 0.0
  %575 = vmatpush1.xpose.msra.mxu0 0.0
  %576 = vmatprep.subr.mxu0 0.0
  %577 = vmatpush1.xpose.msra.mxu0 0.0
  %578 = vmatprep.subr.mxu0 0.0
  %v579 = vand.u32 %v470, 4294901760
  %v580 = vsub.f32 %v470, %v579
  %v581 = vand.u32 %v580, 4294901760
  %v582 = vsub.f32 %v580, %v581
  %v583 = vand.u32 %v582, 4294901760
  %584 = vmatpush1.xpose.msra.mxu0 %v583
  %585 = vmatprep.subr.mxu0 0.0
  %586 = vmatpush2.xpose.msra.mxu0 0.0
  %587 = vmatprep.subr.mxu0 0.0
  %588 = vmatpush2.xpose.msra.mxu0 0.0
  %589 = vmatprep.subr.mxu0 0.0
  %590 = vmatpush2.xpose.msra.mxu0 0.0
  %591 = vmatprep.subr.mxu0 0.0
  %592 = vmatpush2.xpose.msra.mxu0 0.0
  %593 = vmatprep.subr.mxu0 0.0
  %594 = vmatpush2.xpose.msra.mxu0 0.0
  %595 = vmatprep.subr.mxu0 0.0
  %596 = vmatpush2.xpose.msra.mxu0 0.0
  %597 = vmatprep.subr.mxu0 0.0
  %598 = vmatpush2.xpose.msra.mxu0 0.0
  %599 = vmatprep.subr.mxu0 0.0
  %600 = vmatpush2.xpose.msra.mxu0 0.0
  %601 = vmatprep.subr.mxu0 0.0
  %602 = vmatpush2.xpose.msra.mxu0 0.0
  %603 = vmatprep.subr.mxu0 0.0
  %604 = vmatpush2.xpose.msra.mxu0 0.0
  %605 = vmatprep.subr.mxu0 0.0
  %606 = vmatpush2.xpose.msra.mxu0 0.0
  %607 = vmatprep.subr.mxu0 0.0
  %608 = vmatpush2.xpose.msra.mxu0 0.0
  %609 = vmatprep.subr.mxu0 0.0
  %610 = vmatpush2.xpose.msra.mxu0 0.0
  %611 = vmatprep.subr.mxu0 0.0
  %612 = vmatpush2.xpose.msra.mxu0 0.0
  %613 = vmatprep.subr.mxu0 0.0
  %614 = vmatpush2.xpose.msra.mxu0 0.0
  %615 = vmatprep.subr.mxu0 0.0
  %616 = vmatpush2.xpose.msra.mxu0 0.0
  %617 = vmatprep.mubr.f32.mxu0 0.0
  %v618 = vand.u32 %v18, 4294901760
  %619 = vmatmul.mubr.f32.gmra.mxu0 %v618
  %v620 = vpop.f32.mrf.mxu0
  %v621 = vadd.f32 %v545, %v620
  %v622 = vpop.f32.mrf.mxu0
  %623 = vdwg.mxu0
  %624 = vmatprep.subr.mxu0 0.0
  %625 = vmatpush1.xpose.msra.mxu0 0.0
  %626 = vmatprep.subr.mxu0 0.0
  %627 = vmatpush1.xpose.msra.mxu0 0.0
  %628 = vmatprep.subr.mxu0 0.0
  %629 = vmatpush1.xpose.msra.mxu0 0.0
  %630 = vmatprep.subr.mxu0 0.0
  %631 = vmatpush1.xpose.msra.mxu0 0.0
  %632 = vmatprep.subr.mxu0 0.0
  %633 = vmatpush1.xpose.msra.mxu0 0.0
  %634 = vmatprep.subr.mxu0 0.0
  %635 = vmatpush1.xpose.msra.mxu0 0.0
  %636 = vmatprep.subr.mxu0 0.0
  %637 = vmatpush1.xpose.msra.mxu0 0.0
  %638 = vmatprep.subr.mxu0 0.0
  %639 = vmatpush1.xpose.msra.mxu0 0.0
  %640 = vmatprep.subr.mxu0 0.0
  %641 = vmatpush1.xpose.msra.mxu0 0.0
  %642 = vmatprep.subr.mxu0 0.0
  %643 = vmatpush1.xpose.msra.mxu0 0.0
  %644 = vmatprep.subr.mxu0 0.0
  %645 = vmatpush1.xpose.msra.mxu0 0.0
  %646 = vmatprep.subr.mxu0 0.0
  %647 = vmatpush1.xpose.msra.mxu0 0.0
  %648 = vmatprep.subr.mxu0 0.0
  %649 = vmatpush1.xpose.msra.mxu0 0.0
  %650 = vmatprep.subr.mxu0 0.0
  %651 = vmatpush1.xpose.msra.mxu0 0.0
  %652 = vmatprep.subr.mxu0 0.0
  %653 = vmatpush1.xpose.msra.mxu0 0.0
  %654 = vmatprep.subr.mxu0 0.0
  %v655 = vand.u32 %v470, 4294901760
  %v656 = vsub.f32 %v470, %v655
  %657 = vmatpush1.xpose.msra.mxu0 %v656
  %658 = vmatprep.subr.mxu0 0.0
  %659 = vmatpush2.xpose.msra.mxu0 0.0
  %660 = vmatprep.subr.mxu0 0.0
  %661 = vmatpush2.xpose.msra.mxu0 0.0
  %662 = vmatprep.subr.mxu0 0.0
  %663 = vmatpush2.xpose.msra.mxu0 0.0
  %664 = vmatprep.subr.mxu0 0.0
  %665 = vmatpush2.xpose.msra.mxu0 0.0
  %666 = vmatprep.subr.mxu0 0.0
  %667 = vmatpush2.xpose.msra.mxu0 0.0
  %668 = vmatprep.subr.mxu0 0.0
  %669 = vmatpush2.xpose.msra.mxu0 0.0
  %670 = vmatprep.subr.mxu0 0.0
  %671 = vmatpush2.xpose.msra.mxu0 0.0
  %672 = vmatprep.subr.mxu0 0.0
  %673 = vmatpush2.xpose.msra.mxu0 0.0
  %674 = vmatprep.subr.mxu0 0.0
  %675 = vmatpush2.xpose.msra.mxu0 0.0
  %676 = vmatprep.subr.mxu0 0.0
  %677 = vmatpush2.xpose.msra.mxu0 0.0
  %678 = vmatprep.subr.mxu0 0.0
  %679 = vmatpush2.xpose.msra.mxu0 0.0
  %680 = vmatprep.subr.mxu0 0.0
  %681 = vmatpush2.xpose.msra.mxu0 0.0
  %682 = vmatprep.subr.mxu0 0.0
  %683 = vmatpush2.xpose.msra.mxu0 0.0
  %684 = vmatprep.subr.mxu0 0.0
  %685 = vmatpush2.xpose.msra.mxu0 0.0
  %686 = vmatprep.subr.mxu0 0.0
  %687 = vmatpush2.xpose.msra.mxu0 0.0
  %688 = vmatprep.subr.mxu0 0.0
  %689 = vmatpush2.xpose.msra.mxu0 0.0
  %690 = vmatprep.mubr.f32.mxu0 0.0
  %v691 = vand.u32 %v18, 4294901760
  %v692 = vsub.f32 %v18, %v691
  %693 = vmatmul.mubr.f32.gmra.mxu0 %v692
  %v694 = vpop.f32.mrf.mxu0
  %v695 = vadd.f32 %v621, %v694
  %v696 = vpop.f32.mrf.mxu0
  %697 = vdwg.mxu0
  %698 = vmatprep.subr.mxu0 0.0
  %699 = vmatpush1.xpose.msra.mxu0 0.0
  %700 = vmatprep.subr.mxu0 0.0
  %701 = vmatpush1.xpose.msra.mxu0 0.0
  %702 = vmatprep.subr.mxu0 0.0
  %703 = vmatpush1.xpose.msra.mxu0 0.0
  %704 = vmatprep.subr.mxu0 0.0
  %705 = vmatpush1.xpose.msra.mxu0 0.0
  %706 = vmatprep.subr.mxu0 0.0
  %707 = vmatpush1.xpose.msra.mxu0 0.0
  %708 = vmatprep.subr.mxu0 0.0
  %709 = vmatpush1.xpose.msra.mxu0 0.0
  %710 = vmatprep.subr.mxu0 0.0
  %711 = vmatpush1.xpose.msra.mxu0 0.0
  %712 = vmatprep.subr.mxu0 0.0
  %713 = vmatpush1.xpose.msra.mxu0 0.0
  %714 = vmatprep.subr.mxu0 0.0
  %715 = vmatpush1.xpose.msra.mxu0 0.0
  %716 = vmatprep.subr.mxu0 0.0
  %717 = vmatpush1.xpose.msra.mxu0 0.0
  %718 = vmatprep.subr.mxu0 0.0
  %719 = vmatpush1.xpose.msra.mxu0 0.0
  %720 = vmatprep.subr.mxu0 0.0
  %721 = vmatpush1.xpose.msra.mxu0 0.0
  %722 = vmatprep.subr.mxu0 0.0
  %723 = vmatpush1.xpose.msra.mxu0 0.0
  %724 = vmatprep.subr.mxu0 0.0
  %725 = vmatpush1.xpose.msra.mxu0 0.0
  %726 = vmatprep.subr.mxu0 0.0
  %727 = vmatpush1.xpose.msra.mxu0 0.0
  %728 = vmatprep.subr.mxu0 0.0
  %v729 = vand.u32 %v470, 4294901760
  %730 = vmatpush1.xpose.msra.mxu0 %v729
  %731 = vmatprep.subr.mxu0 0.0
  %732 = vmatpush2.xpose.msra.mxu0 0.0
  %733 = vmatprep.subr.mxu0 0.0
  %734 = vmatpush2.xpose.msra.mxu0 0.0
  %735 = vmatprep.subr.mxu0 0.0
  %736 = vmatpush2.xpose.msra.mxu0 0.0
  %737 = vmatprep.subr.mxu0 0.0
  %738 = vmatpush2.xpose.msra.mxu0 0.0
  %739 = vmatprep.subr.mxu0 0.0
  %740 = vmatpush2.xpose.msra.mxu0 0.0
  %741 = vmatprep.subr.mxu0 0.0
  %742 = vmatpush2.xpose.msra.mxu0 0.0
  %743 = vmatprep.subr.mxu0 0.0
  %744 = vmatpush2.xpose.msra.mxu0 0.0
  %745 = vmatprep.subr.mxu0 0.0
  %746 = vmatpush2.xpose.msra.mxu0 0.0
  %747 = vmatprep.subr.mxu0 0.0
  %748 = vmatpush2.xpose.msra.mxu0 0.0
  %749 = vmatprep.subr.mxu0 0.0
  %750 = vmatpush2.xpose.msra.mxu0 0.0
  %751 = vmatprep.subr.mxu0 0.0
  %752 = vmatpush2.xpose.msra.mxu0 0.0
  %753 = vmatprep.subr.mxu0 0.0
  %754 = vmatpush2.xpose.msra.mxu0 0.0
  %755 = vmatprep.subr.mxu0 0.0
  %756 = vmatpush2.xpose.msra.mxu0 0.0
  %757 = vmatprep.subr.mxu0 0.0
  %758 = vmatpush2.xpose.msra.mxu0 0.0
  %759 = vmatprep.subr.mxu0 0.0
  %760 = vmatpush2.xpose.msra.mxu0 0.0
  %761 = vmatprep.subr.mxu0 0.0
  %762 = vmatpush2.xpose.msra.mxu0 0.0
  %763 = vmatprep.mubr.f32.mxu0 0.0
  %v764 = vand.u32 %v18, 4294901760
  %v765 = vsub.f32 %v18, %v764
  %v766 = vand.u32 %v765, 4294901760
  %767 = vmatmul.mubr.f32.gmra.mxu0 %v766
  %v768 = vpop.f32.mrf.mxu0
  %v769 = vadd.f32 %v695, %v768
  %v770 = vpop.f32.mrf.mxu0
  %771 = vdwg.mxu0
  %772 = vmatprep.subr.mxu0 0.0
  %773 = vmatpush1.xpose.msra.mxu0 0.0
  %774 = vmatprep.subr.mxu0 0.0
  %775 = vmatpush1.xpose.msra.mxu0 0.0
  %776 = vmatprep.subr.mxu0 0.0
  %777 = vmatpush1.xpose.msra.mxu0 0.0
  %778 = vmatprep.subr.mxu0 0.0
  %779 = vmatpush1.xpose.msra.mxu0 0.0
  %780 = vmatprep.subr.mxu0 0.0
  %781 = vmatpush1.xpose.msra.mxu0 0.0
  %782 = vmatprep.subr.mxu0 0.0
  %783 = vmatpush1.xpose.msra.mxu0 0.0
  %784 = vmatprep.subr.mxu0 0.0
  %785 = vmatpush1.xpose.msra.mxu0 0.0
  %786 = vmatprep.subr.mxu0 0.0
  %787 = vmatpush1.xpose.msra.mxu0 0.0
  %788 = vmatprep.subr.mxu0 0.0
  %789 = vmatpush1.xpose.msra.mxu0 0.0
  %790 = vmatprep.subr.mxu0 0.0
  %791 = vmatpush1.xpose.msra.mxu0 0.0
  %792 = vmatprep.subr.mxu0 0.0
  %793 = vmatpush1.xpose.msra.mxu0 0.0
  %794 = vmatprep.subr.mxu0 0.0
  %795 = vmatpush1.xpose.msra.mxu0 0.0
  %796 = vmatprep.subr.mxu0 0.0
  %797 = vmatpush1.xpose.msra.mxu0 0.0
  %798 = vmatprep.subr.mxu0 0.0
  %799 = vmatpush1.xpose.msra.mxu0 0.0
  %800 = vmatprep.subr.mxu0 0.0
  %801 = vmatpush1.xpose.msra.mxu0 0.0
  %802 = vmatprep.subr.mxu0 0.0
  %v803 = vand.u32 %v470, 4294901760
  %v804 = vsub.f32 %v470, %v803
  %v805 = vand.u32 %v804, 4294901760
  %806 = vmatpush1.xpose.msra.mxu0 %v805
  %807 = vmatprep.subr.mxu0 0.0
  %808 = vmatpush2.xpose.msra.mxu0 0.0
  %809 = vmatprep.subr.mxu0 0.0
  %810 = vmatpush2.xpose.msra.mxu0 0.0
  %811 = vmatprep.subr.mxu0 0.0
  %812 = vmatpush2.xpose.msra.mxu0 0.0
  %813 = vmatprep.subr.mxu0 0.0
  %814 = vmatpush2.xpose.msra.mxu0 0.0
  %815 = vmatprep.subr.mxu0 0.0
  %816 = vmatpush2.xpose.msra.mxu0 0.0
  %817 = vmatprep.subr.mxu0 0.0
  %818 = vmatpush2.xpose.msra.mxu0 0.0
  %819 = vmatprep.subr.mxu0 0.0
  %820 = vmatpush2.xpose.msra.mxu0 0.0
  %821 = vmatprep.subr.mxu0 0.0
  %822 = vmatpush2.xpose.msra.mxu0 0.0
  %823 = vmatprep.subr.mxu0 0.0
  %824 = vmatpush2.xpose.msra.mxu0 0.0
  %825 = vmatprep.subr.mxu0 0.0
  %826 = vmatpush2.xpose.msra.mxu0 0.0
  %827 = vmatprep.subr.mxu0 0.0
  %828 = vmatpush2.xpose.msra.mxu0 0.0
  %829 = vmatprep.subr.mxu0 0.0
  %830 = vmatpush2.xpose.msra.mxu0 0.0
  %831 = vmatprep.subr.mxu0 0.0
  %832 = vmatpush2.xpose.msra.mxu0 0.0
  %833 = vmatprep.subr.mxu0 0.0
  %834 = vmatpush2.xpose.msra.mxu0 0.0
  %835 = vmatprep.subr.mxu0 0.0
  %836 = vmatpush2.xpose.msra.mxu0 0.0
  %837 = vmatprep.subr.mxu0 0.0
  %838 = vmatpush2.xpose.msra.mxu0 0.0
  %839 = vmatprep.mubr.f32.mxu0 0.0
  %v840 = vand.u32 %v18, 4294901760
  %841 = vmatmul.mubr.f32.gmra.mxu0 %v840
  %v842 = vpop.f32.mrf.mxu0
  %v843 = vadd.f32 %v769, %v842
  %v844 = vpop.f32.mrf.mxu0
  %845 = vdwg.mxu0
  %846 = vmatprep.subr.mxu0 0.0
  %847 = vmatpush1.xpose.msra.mxu0 0.0
  %848 = vmatprep.subr.mxu0 0.0
  %849 = vmatpush1.xpose.msra.mxu0 0.0
  %850 = vmatprep.subr.mxu0 0.0
  %851 = vmatpush1.xpose.msra.mxu0 0.0
  %852 = vmatprep.subr.mxu0 0.0
  %853 = vmatpush1.xpose.msra.mxu0 0.0
  %854 = vmatprep.subr.mxu0 0.0
  %855 = vmatpush1.xpose.msra.mxu0 0.0
  %856 = vmatprep.subr.mxu0 0.0
  %857 = vmatpush1.xpose.msra.mxu0 0.0
  %858 = vmatprep.subr.mxu0 0.0
  %859 = vmatpush1.xpose.msra.mxu0 0.0
  %860 = vmatprep.subr.mxu0 0.0
  %861 = vmatpush1.xpose.msra.mxu0 0.0
  %862 = vmatprep.subr.mxu0 0.0
  %863 = vmatpush1.xpose.msra.mxu0 0.0
  %864 = vmatprep.subr.mxu0 0.0
  %865 = vmatpush1.xpose.msra.mxu0 0.0
  %866 = vmatprep.subr.mxu0 0.0
  %867 = vmatpush1.xpose.msra.mxu0 0.0
  %868 = vmatprep.subr.mxu0 0.0
  %869 = vmatpush1.xpose.msra.mxu0 0.0
  %870 = vmatprep.subr.mxu0 0.0
  %871 = vmatpush1.xpose.msra.mxu0 0.0
  %872 = vmatprep.subr.mxu0 0.0
  %873 = vmatpush1.xpose.msra.mxu0 0.0
  %874 = vmatprep.subr.mxu0 0.0
  %875 = vmatpush1.xpose.msra.mxu0 0.0
  %876 = vmatprep.subr.mxu0 0.0
  %v877 = vand.u32 %v470, 4294901760
  %878 = vmatpush1.xpose.msra.mxu0 %v877
  %879 = vmatprep.subr.mxu0 0.0
  %880 = vmatpush2.xpose.msra.mxu0 0.0
  %881 = vmatprep.subr.mxu0 0.0
  %882 = vmatpush2.xpose.msra.mxu0 0.0
  %883 = vmatprep.subr.mxu0 0.0
  %884 = vmatpush2.xpose.msra.mxu0 0.0
  %885 = vmatprep.subr.mxu0 0.0
  %886 = vmatpush2.xpose.msra.mxu0 0.0
  %887 = vmatprep.subr.mxu0 0.0
  %888 = vmatpush2.xpose.msra.mxu0 0.0
  %889 = vmatprep.subr.mxu0 0.0
  %890 = vmatpush2.xpose.msra.mxu0 0.0
  %891 = vmatprep.subr.mxu0 0.0
  %892 = vmatpush2.xpose.msra.mxu0 0.0
  %893 = vmatprep.subr.mxu0 0.0
  %894 = vmatpush2.xpose.msra.mxu0 0.0
  %895 = vmatprep.subr.mxu0 0.0
  %896 = vmatpush2.xpose.msra.mxu0 0.0
  %897 = vmatprep.subr.mxu0 0.0
  %898 = vmatpush2.xpose.msra.mxu0 0.0
  %899 = vmatprep.subr.mxu0 0.0
  %900 = vmatpush2.xpose.msra.mxu0 0.0
  %901 = vmatprep.subr.mxu0 0.0
  %902 = vmatpush2.xpose.msra.mxu0 0.0
  %903 = vmatprep.subr.mxu0 0.0
  %904 = vmatpush2.xpose.msra.mxu0 0.0
  %905 = vmatprep.subr.mxu0 0.0
  %906 = vmatpush2.xpose.msra.mxu0 0.0
  %907 = vmatprep.subr.mxu0 0.0
  %908 = vmatpush2.xpose.msra.mxu0 0.0
  %909 = vmatprep.subr.mxu0 0.0
  %910 = vmatpush2.xpose.msra.mxu0 0.0
  %911 = vmatprep.mubr.f32.mxu0 0.0
  %v912 = vand.u32 %v18, 4294901760
  %913 = vmatmul.mubr.f32.gmra.mxu0 %v912
  %v914 = vpop.f32.mrf.mxu0
  %v915 = vadd.f32 %v843, %v914
  %v916 = vpop.f32.mrf.mxu0
  %917 = vdwg.mxu0
  %918 = vset.pattern.permute.xlu0 21
  %919 = vperm.xlu0 %918, %v13
  %v920 = vpop.permute.xlu0 %919
  %v922 = vsel %vm17, %v13, 0
  %924 = vmatprep.subr.mxu0 0.0
  %925 = vmatpush1.xpose.msra.mxu0 0.0
  %926 = vmatprep.subr.mxu0 0.0
  %927 = vmatpush1.xpose.msra.mxu0 0.0
  %928 = vmatprep.subr.mxu0 0.0
  %929 = vmatpush1.xpose.msra.mxu0 0.0
  %930 = vmatprep.subr.mxu0 0.0
  %931 = vmatpush1.xpose.msra.mxu0 0.0
  %932 = vmatprep.subr.mxu0 0.0
  %933 = vmatpush1.xpose.msra.mxu0 0.0
  %934 = vmatprep.subr.mxu0 0.0
  %935 = vmatpush1.xpose.msra.mxu0 0.0
  %936 = vmatprep.subr.mxu0 0.0
  %937 = vmatpush1.xpose.msra.mxu0 0.0
  %938 = vmatprep.subr.mxu0 0.0
  %939 = vmatpush1.xpose.msra.mxu0 0.0
  %940 = vmatprep.subr.mxu0 0.0
  %941 = vmatpush1.xpose.msra.mxu0 0.0
  %942 = vmatprep.subr.mxu0 0.0
  %943 = vmatpush1.xpose.msra.mxu0 0.0
  %944 = vmatprep.subr.mxu0 0.0
  %945 = vmatpush1.xpose.msra.mxu0 0.0
  %946 = vmatprep.subr.mxu0 0.0
  %947 = vmatpush1.xpose.msra.mxu0 0.0
  %948 = vmatprep.subr.mxu0 0.0
  %949 = vmatpush1.xpose.msra.mxu0 0.0
  %950 = vmatprep.subr.mxu0 0.0
  %951 = vmatpush1.xpose.msra.mxu0 0.0
  %952 = vmatprep.subr.mxu0 0.0
  %953 = vmatpush1.xpose.msra.mxu0 0.0
  %954 = vmatprep.subr.mxu0 0.0
  %v955 = vand.u32 %v21, 4294901760
  %956 = vmatpush1.xpose.msra.mxu0 %v955
  %957 = vmatprep.subr.mxu0 0.0
  %958 = vmatpush2.xpose.msra.mxu0 0.0
  %959 = vmatprep.subr.mxu0 0.0
  %960 = vmatpush2.xpose.msra.mxu0 0.0
  %961 = vmatprep.subr.mxu0 0.0
  %962 = vmatpush2.xpose.msra.mxu0 0.0
  %963 = vmatprep.subr.mxu0 0.0
  %964 = vmatpush2.xpose.msra.mxu0 0.0
  %965 = vmatprep.subr.mxu0 0.0
  %966 = vmatpush2.xpose.msra.mxu0 0.0
  %967 = vmatprep.subr.mxu0 0.0
  %968 = vmatpush2.xpose.msra.mxu0 0.0
  %969 = vmatprep.subr.mxu0 0.0
  %970 = vmatpush2.xpose.msra.mxu0 0.0
  %971 = vmatprep.subr.mxu0 0.0
  %972 = vmatpush2.xpose.msra.mxu0 0.0
  %973 = vmatprep.subr.mxu0 0.0
  %974 = vmatpush2.xpose.msra.mxu0 0.0
  %975 = vmatprep.subr.mxu0 0.0
  %976 = vmatpush2.xpose.msra.mxu0 0.0
  %977 = vmatprep.subr.mxu0 0.0
  %978 = vmatpush2.xpose.msra.mxu0 0.0
  %979 = vmatprep.subr.mxu0 0.0
  %980 = vmatpush2.xpose.msra.mxu0 0.0
  %981 = vmatprep.subr.mxu0 0.0
  %982 = vmatpush2.xpose.msra.mxu0 0.0
  %983 = vmatprep.subr.mxu0 0.0
  %984 = vmatpush2.xpose.msra.mxu0 0.0
  %985 = vmatprep.subr.mxu0 0.0
  %986 = vmatpush2.xpose.msra.mxu0 0.0
  %987 = vmatprep.subr.mxu0 0.0
  %988 = vmatpush2.xpose.msra.mxu0 0.0
  %989 = vmatprep.mubr.f32.mxu0 0.0
  %v990 = vand.u32 %v922, 4294901760
  %v991 = vsub.f32 %v922, %v990
  %v992 = vand.u32 %v991, 4294901760
  %v993 = vsub.f32 %v991, %v992
  %v994 = vand.u32 %v993, 4294901760
  %995 = vmatmul.mubr.f32.gmra.mxu0 %v994
  %v996 = vpop.f32.mrf.mxu0
  %v997 = vadd.f32 %v920, %v996
  %v998 = vpop.f32.mrf.mxu0
  %999 = vdwg.mxu0
  %1000 = vmatprep.subr.mxu0 0.0
  %1001 = vmatpush1.xpose.msra.mxu0 0.0
  %1002 = vmatprep.subr.mxu0 0.0
  %1003 = vmatpush1.xpose.msra.mxu0 0.0
  %1004 = vmatprep.subr.mxu0 0.0
  %1005 = vmatpush1.xpose.msra.mxu0 0.0
  %1006 = vmatprep.subr.mxu0 0.0
  %1007 = vmatpush1.xpose.msra.mxu0 0.0
  %1008 = vmatprep.subr.mxu0 0.0
  %1009 = vmatpush1.xpose.msra.mxu0 0.0
  %1010 = vmatprep.subr.mxu0 0.0
  %1011 = vmatpush1.xpose.msra.mxu0 0.0
  %1012 = vmatprep.subr.mxu0 0.0
  %1013 = vmatpush1.xpose.msra.mxu0 0.0
  %1014 = vmatprep.subr.mxu0 0.0
  %1015 = vmatpush1.xpose.msra.mxu0 0.0
  %1016 = vmatprep.subr.mxu0 0.0
  %1017 = vmatpush1.xpose.msra.mxu0 0.0
  %1018 = vmatprep.subr.mxu0 0.0
  %1019 = vmatpush1.xpose.msra.mxu0 0.0
  %1020 = vmatprep.subr.mxu0 0.0
  %1021 = vmatpush1.xpose.msra.mxu0 0.0
  %1022 = vmatprep.subr.mxu0 0.0
  %1023 = vmatpush1.xpose.msra.mxu0 0.0
  %1024 = vmatprep.subr.mxu0 0.0
  %1025 = vmatpush1.xpose.msra.mxu0 0.0
  %1026 = vmatprep.subr.mxu0 0.0
  %1027 = vmatpush1.xpose.msra.mxu0 0.0
  %1028 = vmatprep.subr.mxu0 0.0
  %1029 = vmatpush1.xpose.msra.mxu0 0.0
  %1030 = vmatprep.subr.mxu0 0.0
  %v1031 = vand.u32 %v21, 4294901760
  %v1032 = vsub.f32 %v21, %v1031
  %v1033 = vand.u32 %v1032, 4294901760
  %v1034 = vsub.f32 %v1032, %v1033
  %v1035 = vand.u32 %v1034, 4294901760
  %1036 = vmatpush1.xpose.msra.mxu0 %v1035
  %1037 = vmatprep.subr.mxu0 0.0
  %1038 = vmatpush2.xpose.msra.mxu0 0.0
  %1039 = vmatprep.subr.mxu0 0.0
  %1040 = vmatpush2.xpose.msra.mxu0 0.0
  %1041 = vmatprep.subr.mxu0 0.0
  %1042 = vmatpush2.xpose.msra.mxu0 0.0
  %1043 = vmatprep.subr.mxu0 0.0
  %1044 = vmatpush2.xpose.msra.mxu0 0.0
  %1045 = vmatprep.subr.mxu0 0.0
  %1046 = vmatpush2.xpose.msra.mxu0 0.0
  %1047 = vmatprep.subr.mxu0 0.0
  %1048 = vmatpush2.xpose.msra.mxu0 0.0
  %1049 = vmatprep.subr.mxu0 0.0
  %1050 = vmatpush2.xpose.msra.mxu0 0.0
  %1051 = vmatprep.subr.mxu0 0.0
  %1052 = vmatpush2.xpose.msra.mxu0 0.0
  %1053 = vmatprep.subr.mxu0 0.0
  %1054 = vmatpush2.xpose.msra.mxu0 0.0
  %1055 = vmatprep.subr.mxu0 0.0
  %1056 = vmatpush2.xpose.msra.mxu0 0.0
  %1057 = vmatprep.subr.mxu0 0.0
  %1058 = vmatpush2.xpose.msra.mxu0 0.0
  %1059 = vmatprep.subr.mxu0 0.0
  %1060 = vmatpush2.xpose.msra.mxu0 0.0
  %1061 = vmatprep.subr.mxu0 0.0
  %1062 = vmatpush2.xpose.msra.mxu0 0.0
  %1063 = vmatprep.subr.mxu0 0.0
  %1064 = vmatpush2.xpose.msra.mxu0 0.0
  %1065 = vmatprep.subr.mxu0 0.0
  %1066 = vmatpush2.xpose.msra.mxu0 0.0
  %1067 = vmatprep.subr.mxu0 0.0
  %1068 = vmatpush2.xpose.msra.mxu0 0.0
  %1069 = vmatprep.mubr.f32.mxu0 0.0
  %v1070 = vand.u32 %v922, 4294901760
  %1071 = vmatmul.mubr.f32.gmra.mxu0 %v1070
  %v1072 = vpop.f32.mrf.mxu0
  %v1073 = vadd.f32 %v997, %v1072
  %v1074 = vpop.f32.mrf.mxu0
  %1075 = vdwg.mxu0
  %1076 = vmatprep.subr.mxu0 0.0
  %1077 = vmatpush1.xpose.msra.mxu0 0.0
  %1078 = vmatprep.subr.mxu0 0.0
  %1079 = vmatpush1.xpose.msra.mxu0 0.0
  %1080 = vmatprep.subr.mxu0 0.0
  %1081 = vmatpush1.xpose.msra.mxu0 0.0
  %1082 = vmatprep.subr.mxu0 0.0
  %1083 = vmatpush1.xpose.msra.mxu0 0.0
  %1084 = vmatprep.subr.mxu0 0.0
  %1085 = vmatpush1.xpose.msra.mxu0 0.0
  %1086 = vmatprep.subr.mxu0 0.0
  %1087 = vmatpush1.xpose.msra.mxu0 0.0
  %1088 = vmatprep.subr.mxu0 0.0
  %1089 = vmatpush1.xpose.msra.mxu0 0.0
  %1090 = vmatprep.subr.mxu0 0.0
  %1091 = vmatpush1.xpose.msra.mxu0 0.0
  %1092 = vmatprep.subr.mxu0 0.0
  %1093 = vmatpush1.xpose.msra.mxu0 0.0
  %1094 = vmatprep.subr.mxu0 0.0
  %1095 = vmatpush1.xpose.msra.mxu0 0.0
  %1096 = vmatprep.subr.mxu0 0.0
  %1097 = vmatpush1.xpose.msra.mxu0 0.0
  %1098 = vmatprep.subr.mxu0 0.0
  %1099 = vmatpush1.xpose.msra.mxu0 0.0
  %1100 = vmatprep.subr.mxu0 0.0
  %1101 = vmatpush1.xpose.msra.mxu0 0.0
  %1102 = vmatprep.subr.mxu0 0.0
  %1103 = vmatpush1.xpose.msra.mxu0 0.0
  %1104 = vmatprep.subr.mxu0 0.0
  %1105 = vmatpush1.xpose.msra.mxu0 0.0
  %1106 = vmatprep.subr.mxu0 0.0
  %v1107 = vand.u32 %v21, 4294901760
  %v1108 = vsub.f32 %v21, %v1107
  %1109 = vmatpush1.xpose.msra.mxu0 %v1108
  %1110 = vmatprep.subr.mxu0 0.0
  %1111 = vmatpush2.xpose.msra.mxu0 0.0
  %1112 = vmatprep.subr.mxu0 0.0
  %1113 = vmatpush2.xpose.msra.mxu0 0.0
  %1114 = vmatprep.subr.mxu0 0.0
  %1115 = vmatpush2.xpose.msra.mxu0 0.0
  %1116 = vmatprep.subr.mxu0 0.0
  %1117 = vmatpush2.xpose.msra.mxu0 0.0
  %1118 = vmatprep.subr.mxu0 0.0
  %1119 = vmatpush2.xpose.msra.mxu0 0.0
  %1120 = vmatprep.subr.mxu0 0.0
  %1121 = vmatpush2.xpose.msra.mxu0 0.0
  %1122 = vmatprep.subr.mxu0 0.0
  %1123 = vmatpush2.xpose.msra.mxu0 0.0
  %1124 = vmatprep.subr.mxu0 0.0
  %1125 = vmatpush2.xpose.msra.mxu0 0.0
  %1126 = vmatprep.subr.mxu0 0.0
  %1127 = vmatpush2.xpose.msra.mxu0 0.0
  %1128 = vmatprep.subr.mxu0 0.0
  %1129 = vmatpush2.xpose.msra.mxu0 0.0
  %1130 = vmatprep.subr.mxu0 0.0
  %1131 = vmatpush2.xpose.msra.mxu0 0.0
  %1132 = vmatprep.subr.mxu0 0.0
  %1133 = vmatpush2.xpose.msra.mxu0 0.0
  %1134 = vmatprep.subr.mxu0 0.0
  %1135 = vmatpush2.xpose.msra.mxu0 0.0
  %1136 = vmatprep.subr.mxu0 0.0
  %1137 = vmatpush2.xpose.msra.mxu0 0.0
  %1138 = vmatprep.subr.mxu0 0.0
  %1139 = vmatpush2.xpose.msra.mxu0 0.0
  %1140 = vmatprep.subr.mxu0 0.0
  %1141 = vmatpush2.xpose.msra.mxu0 0.0
  %1142 = vmatprep.mubr.f32.mxu0 0.0
  %v1143 = vand.u32 %v922, 4294901760
  %v1144 = vsub.f32 %v922, %v1143
  %1145 = vmatmul.mubr.f32.gmra.mxu0 %v1144
  %v1146 = vpop.f32.mrf.mxu0
  %v1147 = vadd.f32 %v1073, %v1146
  %v1148 = vpop.f32.mrf.mxu0
  %1149 = vdwg.mxu0
  %1150 = vmatprep.subr.mxu0 0.0
  %1151 = vmatpush1.xpose.msra.mxu0 0.0
  %1152 = vmatprep.subr.mxu0 0.0
  %1153 = vmatpush1.xpose.msra.mxu0 0.0
  %1154 = vmatprep.subr.mxu0 0.0
  %1155 = vmatpush1.xpose.msra.mxu0 0.0
  %1156 = vmatprep.subr.mxu0 0.0
  %1157 = vmatpush1.xpose.msra.mxu0 0.0
  %1158 = vmatprep.subr.mxu0 0.0
  %1159 = vmatpush1.xpose.msra.mxu0 0.0
  %1160 = vmatprep.subr.mxu0 0.0
  %1161 = vmatpush1.xpose.msra.mxu0 0.0
  %1162 = vmatprep.subr.mxu0 0.0
  %1163 = vmatpush1.xpose.msra.mxu0 0.0
  %1164 = vmatprep.subr.mxu0 0.0
  %1165 = vmatpush1.xpose.msra.mxu0 0.0
  %1166 = vmatprep.subr.mxu0 0.0
  %1167 = vmatpush1.xpose.msra.mxu0 0.0
  %1168 = vmatprep.subr.mxu0 0.0
  %1169 = vmatpush1.xpose.msra.mxu0 0.0
  %1170 = vmatprep.subr.mxu0 0.0
  %1171 = vmatpush1.xpose.msra.mxu0 0.0
  %1172 = vmatprep.subr.mxu0 0.0
  %1173 = vmatpush1.xpose.msra.mxu0 0.0
  %1174 = vmatprep.subr.mxu0 0.0
  %1175 = vmatpush1.xpose.msra.mxu0 0.0
  %1176 = vmatprep.subr.mxu0 0.0
  %1177 = vmatpush1.xpose.msra.mxu0 0.0
  %1178 = vmatprep.subr.mxu0 0.0
  %1179 = vmatpush1.xpose.msra.mxu0 0.0
  %1180 = vmatprep.subr.mxu0 0.0
  %v1181 = vand.u32 %v21, 4294901760
  %1182 = vmatpush1.xpose.msra.mxu0 %v1181
  %1183 = vmatprep.subr.mxu0 0.0
  %1184 = vmatpush2.xpose.msra.mxu0 0.0
  %1185 = vmatprep.subr.mxu0 0.0
  %1186 = vmatpush2.xpose.msra.mxu0 0.0
  %1187 = vmatprep.subr.mxu0 0.0
  %1188 = vmatpush2.xpose.msra.mxu0 0.0
  %1189 = vmatprep.subr.mxu0 0.0
  %1190 = vmatpush2.xpose.msra.mxu0 0.0
  %1191 = vmatprep.subr.mxu0 0.0
  %1192 = vmatpush2.xpose.msra.mxu0 0.0
  %1193 = vmatprep.subr.mxu0 0.0
  %1194 = vmatpush2.xpose.msra.mxu0 0.0
  %1195 = vmatprep.subr.mxu0 0.0
  %1196 = vmatpush2.xpose.msra.mxu0 0.0
  %1197 = vmatprep.subr.mxu0 0.0
  %1198 = vmatpush2.xpose.msra.mxu0 0.0
  %1199 = vmatprep.subr.mxu0 0.0
  %1200 = vmatpush2.xpose.msra.mxu0 0.0
  %1201 = vmatprep.subr.mxu0 0.0
  %1202 = vmatpush2.xpose.msra.mxu0 0.0
  %1203 = vmatprep.subr.mxu0 0.0
  %1204 = vmatpush2.xpose.msra.mxu0 0.0
  %1205 = vmatprep.subr.mxu0 0.0
  %1206 = vmatpush2.xpose.msra.mxu0 0.0
  %1207 = vmatprep.subr.mxu0 0.0
  %1208 = vmatpush2.xpose.msra.mxu0 0.0
  %1209 = vmatprep.subr.mxu0 0.0
  %1210 = vmatpush2.xpose.msra.mxu0 0.0
  %1211 = vmatprep.subr.mxu0 0.0
  %1212 = vmatpush2.xpose.msra.mxu0 0.0
  %1213 = vmatprep.subr.mxu0 0.0
  %1214 = vmatpush2.xpose.msra.mxu0 0.0
  %1215 = vmatprep.mubr.f32.mxu0 0.0
  %v1216 = vand.u32 %v922, 4294901760
  %v1217 = vsub.f32 %v922, %v1216
  %v1218 = vand.u32 %v1217, 4294901760
  %1219 = vmatmul.mubr.f32.gmra.mxu0 %v1218
  %v1220 = vpop.f32.mrf.mxu0
  %v1221 = vadd.f32 %v1147, %v1220
  %v1222 = vpop.f32.mrf.mxu0
  %1223 = vdwg.mxu0
  %1224 = vmatprep.subr.mxu0 0.0
  %1225 = vmatpush1.xpose.msra.mxu0 0.0
  %1226 = vmatprep.subr.mxu0 0.0
  %1227 = vmatpush1.xpose.msra.mxu0 0.0
  %1228 = vmatprep.subr.mxu0 0.0
  %1229 = vmatpush1.xpose.msra.mxu0 0.0
  %1230 = vmatprep.subr.mxu0 0.0
  %1231 = vmatpush1.xpose.msra.mxu0 0.0
  %1232 = vmatprep.subr.mxu0 0.0
  %1233 = vmatpush1.xpose.msra.mxu0 0.0
  %1234 = vmatprep.subr.mxu0 0.0
  %1235 = vmatpush1.xpose.msra.mxu0 0.0
  %1236 = vmatprep.subr.mxu0 0.0
  %1237 = vmatpush1.xpose.msra.mxu0 0.0
  %1238 = vmatprep.subr.mxu0 0.0
  %1239 = vmatpush1.xpose.msra.mxu0 0.0
  %1240 = vmatprep.subr.mxu0 0.0
  %1241 = vmatpush1.xpose.msra.mxu0 0.0
  %1242 = vmatprep.subr.mxu0 0.0
  %1243 = vmatpush1.xpose.msra.mxu0 0.0
  %1244 = vmatprep.subr.mxu0 0.0
  %1245 = vmatpush1.xpose.msra.mxu0 0.0
  %1246 = vmatprep.subr.mxu0 0.0
  %1247 = vmatpush1.xpose.msra.mxu0 0.0
  %1248 = vmatprep.subr.mxu0 0.0
  %1249 = vmatpush1.xpose.msra.mxu0 0.0
  %1250 = vmatprep.subr.mxu0 0.0
  %1251 = vmatpush1.xpose.msra.mxu0 0.0
  %1252 = vmatprep.subr.mxu0 0.0
  %1253 = vmatpush1.xpose.msra.mxu0 0.0
  %1254 = vmatprep.subr.mxu0 0.0
  %v1255 = vand.u32 %v21, 4294901760
  %v1256 = vsub.f32 %v21, %v1255
  %v1257 = vand.u32 %v1256, 4294901760
  %1258 = vmatpush1.xpose.msra.mxu0 %v1257
  %1259 = vmatprep.subr.mxu0 0.0
  %1260 = vmatpush2.xpose.msra.mxu0 0.0
  %1261 = vmatprep.subr.mxu0 0.0
  %1262 = vmatpush2.xpose.msra.mxu0 0.0
  %1263 = vmatprep.subr.mxu0 0.0
  %1264 = vmatpush2.xpose.msra.mxu0 0.0
  %1265 = vmatprep.subr.mxu0 0.0
  %1266 = vmatpush2.xpose.msra.mxu0 0.0
  %1267 = vmatprep.subr.mxu0 0.0
  %1268 = vmatpush2.xpose.msra.mxu0 0.0
  %1269 = vmatprep.subr.mxu0 0.0
  %1270 = vmatpush2.xpose.msra.mxu0 0.0
  %1271 = vmatprep.subr.mxu0 0.0
  %1272 = vmatpush2.xpose.msra.mxu0 0.0
  %1273 = vmatprep.subr.mxu0 0.0
  %1274 = vmatpush2.xpose.msra.mxu0 0.0
  %1275 = vmatprep.subr.mxu0 0.0
  %1276 = vmatpush2.xpose.msra.mxu0 0.0
  %1277 = vmatprep.subr.mxu0 0.0
  %1278 = vmatpush2.xpose.msra.mxu0 0.0
  %1279 = vmatprep.subr.mxu0 0.0
  %1280 = vmatpush2.xpose.msra.mxu0 0.0
  %1281 = vmatprep.subr.mxu0 0.0
  %1282 = vmatpush2.xpose.msra.mxu0 0.0
  %1283 = vmatprep.subr.mxu0 0.0
  %1284 = vmatpush2.xpose.msra.mxu0 0.0
  %1285 = vmatprep.subr.mxu0 0.0
  %1286 = vmatpush2.xpose.msra.mxu0 0.0
  %1287 = vmatprep.subr.mxu0 0.0
  %1288 = vmatpush2.xpose.msra.mxu0 0.0
  %1289 = vmatprep.subr.mxu0 0.0
  %1290 = vmatpush2.xpose.msra.mxu0 0.0
  %1291 = vmatprep.mubr.f32.mxu0 0.0
  %v1292 = vand.u32 %v922, 4294901760
  %1293 = vmatmul.mubr.f32.gmra.mxu0 %v1292
  %v1294 = vpop.f32.mrf.mxu0
  %v1295 = vadd.f32 %v1221, %v1294
  %v1296 = vpop.f32.mrf.mxu0
  %1297 = vdwg.mxu0
  %1298 = vmatprep.subr.mxu0 0.0
  %1299 = vmatpush1.xpose.msra.mxu0 0.0
  %1300 = vmatprep.subr.mxu0 0.0
  %1301 = vmatpush1.xpose.msra.mxu0 0.0
  %1302 = vmatprep.subr.mxu0 0.0
  %1303 = vmatpush1.xpose.msra.mxu0 0.0
  %1304 = vmatprep.subr.mxu0 0.0
  %1305 = vmatpush1.xpose.msra.mxu0 0.0
  %1306 = vmatprep.subr.mxu0 0.0
  %1307 = vmatpush1.xpose.msra.mxu0 0.0
  %1308 = vmatprep.subr.mxu0 0.0
  %1309 = vmatpush1.xpose.msra.mxu0 0.0
  %1310 = vmatprep.subr.mxu0 0.0
  %1311 = vmatpush1.xpose.msra.mxu0 0.0
  %1312 = vmatprep.subr.mxu0 0.0
  %1313 = vmatpush1.xpose.msra.mxu0 0.0
  %1314 = vmatprep.subr.mxu0 0.0
  %1315 = vmatpush1.xpose.msra.mxu0 0.0
  %1316 = vmatprep.subr.mxu0 0.0
  %1317 = vmatpush1.xpose.msra.mxu0 0.0
  %1318 = vmatprep.subr.mxu0 0.0
  %1319 = vmatpush1.xpose.msra.mxu0 0.0
  %1320 = vmatprep.subr.mxu0 0.0
  %1321 = vmatpush1.xpose.msra.mxu0 0.0
  %1322 = vmatprep.subr.mxu0 0.0
  %1323 = vmatpush1.xpose.msra.mxu0 0.0
  %1324 = vmatprep.subr.mxu0 0.0
  %1325 = vmatpush1.xpose.msra.mxu0 0.0
  %1326 = vmatprep.subr.mxu0 0.0
  %1327 = vmatpush1.xpose.msra.mxu0 0.0
  %1328 = vmatprep.subr.mxu0 0.0
  %v1329 = vand.u32 %v21, 4294901760
  %1330 = vmatpush1.xpose.msra.mxu0 %v1329
  %1331 = vmatprep.subr.mxu0 0.0
  %1332 = vmatpush2.xpose.msra.mxu0 0.0
  %1333 = vmatprep.subr.mxu0 0.0
  %1334 = vmatpush2.xpose.msra.mxu0 0.0
  %1335 = vmatprep.subr.mxu0 0.0
  %1336 = vmatpush2.xpose.msra.mxu0 0.0
  %1337 = vmatprep.subr.mxu0 0.0
  %1338 = vmatpush2.xpose.msra.mxu0 0.0
  %1339 = vmatprep.subr.mxu0 0.0
  %1340 = vmatpush2.xpose.msra.mxu0 0.0
  %1341 = vmatprep.subr.mxu0 0.0
  %1342 = vmatpush2.xpose.msra.mxu0 0.0
  %1343 = vmatprep.subr.mxu0 0.0
  %1344 = vmatpush2.xpose.msra.mxu0 0.0
  %1345 = vmatprep.subr.mxu0 0.0
  %1346 = vmatpush2.xpose.msra.mxu0 0.0
  %1347 = vmatprep.subr.mxu0 0.0
  %1348 = vmatpush2.xpose.msra.mxu0 0.0
  %1349 = vmatprep.subr.mxu0 0.0
  %1350 = vmatpush2.xpose.msra.mxu0 0.0
  %1351 = vmatprep.subr.mxu0 0.0
  %1352 = vmatpush2.xpose.msra.mxu0 0.0
  %1353 = vmatprep.subr.mxu0 0.0
  %1354 = vmatpush2.xpose.msra.mxu0 0.0
  %1355 = vmatprep.subr.mxu0 0.0
  %1356 = vmatpush2.xpose.msra.mxu0 0.0
  %1357 = vmatprep.subr.mxu0 0.0
  %1358 = vmatpush2.xpose.msra.mxu0 0.0
  %1359 = vmatprep.subr.mxu0 0.0
  %1360 = vmatpush2.xpose.msra.mxu0 0.0
  %1361 = vmatprep.subr.mxu0 0.0
  %1362 = vmatpush2.xpose.msra.mxu0 0.0
  %1363 = vmatprep.mubr.f32.mxu0 0.0
  %v1364 = vand.u32 %v922, 4294901760
  %1365 = vmatmul.mubr.f32.gmra.mxu0 %v1364
  %v1366 = vpop.f32.mrf.mxu0
  %v1367 = vadd.f32 %v1295, %v1366
  %v1368 = vpop.f32.mrf.mxu0
  %1369 = vdwg.mxu0
  %1370 = vmatprep.subr.mxu0 0.0
  %1371 = vmatpush1.xpose.msra.mxu0 0.0
  %1372 = vmatprep.subr.mxu0 0.0
  %1373 = vmatpush1.xpose.msra.mxu0 0.0
  %1374 = vmatprep.subr.mxu0 0.0
  %1375 = vmatpush1.xpose.msra.mxu0 0.0
  %1376 = vmatprep.subr.mxu0 0.0
  %1377 = vmatpush1.xpose.msra.mxu0 0.0
  %1378 = vmatprep.subr.mxu0 0.0
  %1379 = vmatpush1.xpose.msra.mxu0 0.0
  %1380 = vmatprep.subr.mxu0 0.0
  %1381 = vmatpush1.xpose.msra.mxu0 0.0
  %1382 = vmatprep.subr.mxu0 0.0
  %1383 = vmatpush1.xpose.msra.mxu0 0.0
  %1384 = vmatprep.subr.mxu0 0.0
  %1385 = vmatpush1.xpose.msra.mxu0 0.0
  %1386 = vmatprep.subr.mxu0 0.0
  %1387 = vmatpush1.xpose.msra.mxu0 0.0
  %1388 = vmatprep.subr.mxu0 0.0
  %1389 = vmatpush1.xpose.msra.mxu0 0.0
  %1390 = vmatprep.subr.mxu0 0.0
  %1391 = vmatpush1.xpose.msra.mxu0 0.0
  %1392 = vmatprep.subr.mxu0 0.0
  %1393 = vmatpush1.xpose.msra.mxu0 0.0
  %1394 = vmatprep.subr.mxu0 0.0
  %1395 = vmatpush1.xpose.msra.mxu0 0.0
  %1396 = vmatprep.subr.mxu0 0.0
  %1397 = vmatpush1.xpose.msra.mxu0 0.0
  %1398 = vmatprep.subr.mxu0 0.0
  %1399 = vmatpush1.xpose.msra.mxu0 0.0
  %1400 = vmatprep.subr.mxu0 0.0
  %v1401 = vand.u32 %v470, 4294901760
  %1402 = vmatpush1.xpose.msra.mxu0 %v1401
  %1403 = vmatprep.subr.mxu0 0.0
  %1404 = vmatpush2.xpose.msra.mxu0 0.0
  %1405 = vmatprep.subr.mxu0 0.0
  %1406 = vmatpush2.xpose.msra.mxu0 0.0
  %1407 = vmatprep.subr.mxu0 0.0
  %1408 = vmatpush2.xpose.msra.mxu0 0.0
  %1409 = vmatprep.subr.mxu0 0.0
  %1410 = vmatpush2.xpose.msra.mxu0 0.0
  %1411 = vmatprep.subr.mxu0 0.0
  %1412 = vmatpush2.xpose.msra.mxu0 0.0
  %1413 = vmatprep.subr.mxu0 0.0
  %1414 = vmatpush2.xpose.msra.mxu0 0.0
  %1415 = vmatprep.subr.mxu0 0.0
  %1416 = vmatpush2.xpose.msra.mxu0 0.0
  %1417 = vmatprep.subr.mxu0 0.0
  %1418 = vmatpush2.xpose.msra.mxu0 0.0
  %1419 = vmatprep.subr.mxu0 0.0
  %1420 = vmatpush2.xpose.msra.mxu0 0.0
  %1421 = vmatprep.subr.mxu0 0.0
  %1422 = vmatpush2.xpose.msra.mxu0 0.0
  %1423 = vmatprep.subr.mxu0 0.0
  %1424 = vmatpush2.xpose.msra.mxu0 0.0
  %1425 = vmatprep.subr.mxu0 0.0
  %1426 = vmatpush2.xpose.msra.mxu0 0.0
  %1427 = vmatprep.subr.mxu0 0.0
  %1428 = vmatpush2.xpose.msra.mxu0 0.0
  %1429 = vmatprep.subr.mxu0 0.0
  %1430 = vmatpush2.xpose.msra.mxu0 0.0
  %1431 = vmatprep.subr.mxu0 0.0
  %1432 = vmatpush2.xpose.msra.mxu0 0.0
  %1433 = vmatprep.subr.mxu0 0.0
  %1434 = vmatpush2.xpose.msra.mxu0 0.0
  %1435 = vmatprep.mubr.f32.mxu0 0.0
  %v1436 = vand.u32 %v922, 4294901760
  %v1437 = vsub.f32 %v922, %v1436
  %v1438 = vand.u32 %v1437, 4294901760
  %v1439 = vsub.f32 %v1437, %v1438
  %v1440 = vand.u32 %v1439, 4294901760
  %1441 = vmatmul.mubr.f32.gmra.mxu0 %v1440
  %v1442 = vpop.f32.mrf.mxu0
  %v1443 = vadd.f32 %v920, %v1442
  %v1444 = vpop.f32.mrf.mxu0
  %1445 = vdwg.mxu0
  %1446 = vmatprep.subr.mxu0 0.0
  %1447 = vmatpush1.xpose.msra.mxu0 0.0
  %1448 = vmatprep.subr.mxu0 0.0
  %1449 = vmatpush1.xpose.msra.mxu0 0.0
  %1450 = vmatprep.subr.mxu0 0.0
  %1451 = vmatpush1.xpose.msra.mxu0 0.0
  %1452 = vmatprep.subr.mxu0 0.0
  %1453 = vmatpush1.xpose.msra.mxu0 0.0
  %1454 = vmatprep.subr.mxu0 0.0
  %1455 = vmatpush1.xpose.msra.mxu0 0.0
  %1456 = vmatprep.subr.mxu0 0.0
  %1457 = vmatpush1.xpose.msra.mxu0 0.0
  %1458 = vmatprep.subr.mxu0 0.0
  %1459 = vmatpush1.xpose.msra.mxu0 0.0
  %1460 = vmatprep.subr.mxu0 0.0
  %1461 = vmatpush1.xpose.msra.mxu0 0.0
  %1462 = vmatprep.subr.mxu0 0.0
  %1463 = vmatpush1.xpose.msra.mxu0 0.0
  %1464 = vmatprep.subr.mxu0 0.0
  %1465 = vmatpush1.xpose.msra.mxu0 0.0
  %1466 = vmatprep.subr.mxu0 0.0
  %1467 = vmatpush1.xpose.msra.mxu0 0.0
  %1468 = vmatprep.subr.mxu0 0.0
  %1469 = vmatpush1.xpose.msra.mxu0 0.0
  %1470 = vmatprep.subr.mxu0 0.0
  %1471 = vmatpush1.xpose.msra.mxu0 0.0
  %1472 = vmatprep.subr.mxu0 0.0
  %1473 = vmatpush1.xpose.msra.mxu0 0.0
  %1474 = vmatprep.subr.mxu0 0.0
  %1475 = vmatpush1.xpose.msra.mxu0 0.0
  %1476 = vmatprep.subr.mxu0 0.0
  %v1477 = vand.u32 %v470, 4294901760
  %v1478 = vsub.f32 %v470, %v1477
  %v1479 = vand.u32 %v1478, 4294901760
  %v1480 = vsub.f32 %v1478, %v1479
  %v1481 = vand.u32 %v1480, 4294901760
  %1482 = vmatpush1.xpose.msra.mxu0 %v1481
  %1483 = vmatprep.subr.mxu0 0.0
  %1484 = vmatpush2.xpose.msra.mxu0 0.0
  %1485 = vmatprep.subr.mxu0 0.0
  %1486 = vmatpush2.xpose.msra.mxu0 0.0
  %1487 = vmatprep.subr.mxu0 0.0
  %1488 = vmatpush2.xpose.msra.mxu0 0.0
  %1489 = vmatprep.subr.mxu0 0.0
  %1490 = vmatpush2.xpose.msra.mxu0 0.0
  %1491 = vmatprep.subr.mxu0 0.0
  %1492 = vmatpush2.xpose.msra.mxu0 0.0
  %1493 = vmatprep.subr.mxu0 0.0
  %1494 = vmatpush2.xpose.msra.mxu0 0.0
  %1495 = vmatprep.subr.mxu0 0.0
  %1496 = vmatpush2.xpose.msra.mxu0 0.0
  %1497 = vmatprep.subr.mxu0 0.0
  %1498 = vmatpush2.xpose.msra.mxu0 0.0
  %1499 = vmatprep.subr.mxu0 0.0
  %1500 = vmatpush2.xpose.msra.mxu0 0.0
  %1501 = vmatprep.subr.mxu0 0.0
  %1502 = vmatpush2.xpose.msra.mxu0 0.0
  %1503 = vmatprep.subr.mxu0 0.0
  %1504 = vmatpush2.xpose.msra.mxu0 0.0
  %1505 = vmatprep.subr.mxu0 0.0
  %1506 = vmatpush2.xpose.msra.mxu0 0.0
  %1507 = vmatprep.subr.mxu0 0.0
  %1508 = vmatpush2.xpose.msra.mxu0 0.0
  %1509 = vmatprep.subr.mxu0 0.0
  %1510 = vmatpush2.xpose.msra.mxu0 0.0
  %1511 = vmatprep.subr.mxu0 0.0
  %1512 = vmatpush2.xpose.msra.mxu0 0.0
  %1513 = vmatprep.subr.mxu0 0.0
  %1514 = vmatpush2.xpose.msra.mxu0 0.0
  %1515 = vmatprep.mubr.f32.mxu0 0.0
  %v1516 = vand.u32 %v922, 4294901760
  %1517 = vmatmul.mubr.f32.gmra.mxu0 %v1516
  %v1518 = vpop.f32.mrf.mxu0
  %v1519 = vadd.f32 %v1443, %v1518
  %v1520 = vpop.f32.mrf.mxu0
  %1521 = vdwg.mxu0
  %1522 = vmatprep.subr.mxu0 0.0
  %1523 = vmatpush1.xpose.msra.mxu0 0.0
  %1524 = vmatprep.subr.mxu0 0.0
  %1525 = vmatpush1.xpose.msra.mxu0 0.0
  %1526 = vmatprep.subr.mxu0 0.0
  %1527 = vmatpush1.xpose.msra.mxu0 0.0
  %1528 = vmatprep.subr.mxu0 0.0
  %1529 = vmatpush1.xpose.msra.mxu0 0.0
  %1530 = vmatprep.subr.mxu0 0.0
  %1531 = vmatpush1.xpose.msra.mxu0 0.0
  %1532 = vmatprep.subr.mxu0 0.0
  %1533 = vmatpush1.xpose.msra.mxu0 0.0
  %1534 = vmatprep.subr.mxu0 0.0
  %1535 = vmatpush1.xpose.msra.mxu0 0.0
  %1536 = vmatprep.subr.mxu0 0.0
  %1537 = vmatpush1.xpose.msra.mxu0 0.0
  %1538 = vmatprep.subr.mxu0 0.0
  %1539 = vmatpush1.xpose.msra.mxu0 0.0
  %1540 = vmatprep.subr.mxu0 0.0
  %1541 = vmatpush1.xpose.msra.mxu0 0.0
  %1542 = vmatprep.subr.mxu0 0.0
  %1543 = vmatpush1.xpose.msra.mxu0 0.0
  %1544 = vmatprep.subr.mxu0 0.0
  %1545 = vmatpush1.xpose.msra.mxu0 0.0
  %1546 = vmatprep.subr.mxu0 0.0
  %1547 = vmatpush1.xpose.msra.mxu0 0.0
  %1548 = vmatprep.subr.mxu0 0.0
  %1549 = vmatpush1.xpose.msra.mxu0 0.0
  %1550 = vmatprep.subr.mxu0 0.0
  %1551 = vmatpush1.xpose.msra.mxu0 0.0
  %1552 = vmatprep.subr.mxu0 0.0
  %v1553 = vand.u32 %v470, 4294901760
  %v1554 = vsub.f32 %v470, %v1553
  %1555 = vmatpush1.xpose.msra.mxu0 %v1554
  %1556 = vmatprep.subr.mxu0 0.0
  %1557 = vmatpush2.xpose.msra.mxu0 0.0
  %1558 = vmatprep.subr.mxu0 0.0
  %1559 = vmatpush2.xpose.msra.mxu0 0.0
  %1560 = vmatprep.subr.mxu0 0.0
  %1561 = vmatpush2.xpose.msra.mxu0 0.0
  %1562 = vmatprep.subr.mxu0 0.0
  %1563 = vmatpush2.xpose.msra.mxu0 0.0
  %1564 = vmatprep.subr.mxu0 0.0
  %1565 = vmatpush2.xpose.msra.mxu0 0.0
  %1566 = vmatprep.subr.mxu0 0.0
  %1567 = vmatpush2.xpose.msra.mxu0 0.0
  %1568 = vmatprep.subr.mxu0 0.0
  %1569 = vmatpush2.xpose.msra.mxu0 0.0
  %1570 = vmatprep.subr.mxu0 0.0
  %1571 = vmatpush2.xpose.msra.mxu0 0.0
  %1572 = vmatprep.subr.mxu0 0.0
  %1573 = vmatpush2.xpose.msra.mxu0 0.0
  %1574 = vmatprep.subr.mxu0 0.0
  %1575 = vmatpush2.xpose.msra.mxu0 0.0
  %1576 = vmatprep.subr.mxu0 0.0
  %1577 = vmatpush2.xpose.msra.mxu0 0.0
  %1578 = vmatprep.subr.mxu0 0.0
  %1579 = vmatpush2.xpose.msra.mxu0 0.0
  %1580 = vmatprep.subr.mxu0 0.0
  %1581 = vmatpush2.xpose.msra.mxu0 0.0
  %1582 = vmatprep.subr.mxu0 0.0
  %1583 = vmatpush2.xpose.msra.mxu0 0.0
  %1584 = vmatprep.subr.mxu0 0.0
  %1585 = vmatpush2.xpose.msra.mxu0 0.0
  %1586 = vmatprep.subr.mxu0 0.0
  %1587 = vmatpush2.xpose.msra.mxu0 0.0
  %1588 = vmatprep.mubr.f32.mxu0 0.0
  %v1589 = vand.u32 %v922, 4294901760
  %v1590 = vsub.f32 %v922, %v1589
  %1591 = vmatmul.mubr.f32.gmra.mxu0 %v1590
  %v1592 = vpop.f32.mrf.mxu0
  %v1593 = vadd.f32 %v1519, %v1592
  %v1594 = vpop.f32.mrf.mxu0
  %1595 = vdwg.mxu0
  %1596 = vmatprep.subr.mxu0 0.0
  %1597 = vmatpush1.xpose.msra.mxu0 0.0
  %1598 = vmatprep.subr.mxu0 0.0
  %1599 = vmatpush1.xpose.msra.mxu0 0.0
  %1600 = vmatprep.subr.mxu0 0.0
  %1601 = vmatpush1.xpose.msra.mxu0 0.0
  %1602 = vmatprep.subr.mxu0 0.0
  %1603 = vmatpush1.xpose.msra.mxu0 0.0
  %1604 = vmatprep.subr.mxu0 0.0
  %1605 = vmatpush1.xpose.msra.mxu0 0.0
  %1606 = vmatprep.subr.mxu0 0.0
  %1607 = vmatpush1.xpose.msra.mxu0 0.0
  %1608 = vmatprep.subr.mxu0 0.0
  %1609 = vmatpush1.xpose.msra.mxu0 0.0
  %1610 = vmatprep.subr.mxu0 0.0
  %1611 = vmatpush1.xpose.msra.mxu0 0.0
  %1612 = vmatprep.subr.mxu0 0.0
  %1613 = vmatpush1.xpose.msra.mxu0 0.0
  %1614 = vmatprep.subr.mxu0 0.0
  %1615 = vmatpush1.xpose.msra.mxu0 0.0
  %1616 = vmatprep.subr.mxu0 0.0
  %1617 = vmatpush1.xpose.msra.mxu0 0.0
  %1618 = vmatprep.subr.mxu0 0.0
  %1619 = vmatpush1.xpose.msra.mxu0 0.0
  %1620 = vmatprep.subr.mxu0 0.0
  %1621 = vmatpush1.xpose.msra.mxu0 0.0
  %1622 = vmatprep.subr.mxu0 0.0
  %1623 = vmatpush1.xpose.msra.mxu0 0.0
  %1624 = vmatprep.subr.mxu0 0.0
  %1625 = vmatpush1.xpose.msra.mxu0 0.0
  %1626 = vmatprep.subr.mxu0 0.0
  %v1627 = vand.u32 %v470, 4294901760
  %1628 = vmatpush1.xpose.msra.mxu0 %v1627
  %1629 = vmatprep.subr.mxu0 0.0
  %1630 = vmatpush2.xpose.msra.mxu0 0.0
  %1631 = vmatprep.subr.mxu0 0.0
  %1632 = vmatpush2.xpose.msra.mxu0 0.0
  %1633 = vmatprep.subr.mxu0 0.0
  %1634 = vmatpush2.xpose.msra.mxu0 0.0
  %1635 = vmatprep.subr.mxu0 0.0
  %1636 = vmatpush2.xpose.msra.mxu0 0.0
  %1637 = vmatprep.subr.mxu0 0.0
  %1638 = vmatpush2.xpose.msra.mxu0 0.0
  %1639 = vmatprep.subr.mxu0 0.0
  %1640 = vmatpush2.xpose.msra.mxu0 0.0
  %1641 = vmatprep.subr.mxu0 0.0
  %1642 = vmatpush2.xpose.msra.mxu0 0.0
  %1643 = vmatprep.subr.mxu0 0.0
  %1644 = vmatpush2.xpose.msra.mxu0 0.0
  %1645 = vmatprep.subr.mxu0 0.0
  %1646 = vmatpush2.xpose.msra.mxu0 0.0
  %1647 = vmatprep.subr.mxu0 0.0
  %1648 = vmatpush2.xpose.msra.mxu0 0.0
  %1649 = vmatprep.subr.mxu0 0.0
  %1650 = vmatpush2.xpose.msra.mxu0 0.0
  %1651 = vmatprep.subr.mxu0 0.0
  %1652 = vmatpush2.xpose.msra.mxu0 0.0
  %1653 = vmatprep.subr.mxu0 0.0
  %1654 = vmatpush2.xpose.msra.mxu0 0.0
  %1655 = vmatprep.subr.mxu0 0.0
  %1656 = vmatpush2.xpose.msra.mxu0 0.0
  %1657 = vmatprep.subr.mxu0 0.0
  %1658 = vmatpush2.xpose.msra.mxu0 0.0
  %1659 = vmatprep.subr.mxu0 0.0
  %1660 = vmatpush2.xpose.msra.mxu0 0.0
  %1661 = vmatprep.mubr.f32.mxu0 0.0
  %v1662 = vand.u32 %v922, 4294901760
  %v1663 = vsub.f32 %v922, %v1662
  %v1664 = vand.u32 %v1663, 4294901760
  %1665 = vmatmul.mubr.f32.gmra.mxu0 %v1664
  %v1666 = vpop.f32.mrf.mxu0
  %v1667 = vadd.f32 %v1593, %v1666
  %v1668 = vpop.f32.mrf.mxu0
  %1669 = vdwg.mxu0
  %1670 = vmatprep.subr.mxu0 0.0
  %1671 = vmatpush1.xpose.msra.mxu0 0.0
  %1672 = vmatprep.subr.mxu0 0.0
  %1673 = vmatpush1.xpose.msra.mxu0 0.0
  %1674 = vmatprep.subr.mxu0 0.0
  %1675 = vmatpush1.xpose.msra.mxu0 0.0
  %1676 = vmatprep.subr.mxu0 0.0
  %1677 = vmatpush1.xpose.msra.mxu0 0.0
  %1678 = vmatprep.subr.mxu0 0.0
  %1679 = vmatpush1.xpose.msra.mxu0 0.0
  %1680 = vmatprep.subr.mxu0 0.0
  %1681 = vmatpush1.xpose.msra.mxu0 0.0
  %1682 = vmatprep.subr.mxu0 0.0
  %1683 = vmatpush1.xpose.msra.mxu0 0.0
  %1684 = vmatprep.subr.mxu0 0.0
  %1685 = vmatpush1.xpose.msra.mxu0 0.0
  %1686 = vmatprep.subr.mxu0 0.0
  %1687 = vmatpush1.xpose.msra.mxu0 0.0
  %1688 = vmatprep.subr.mxu0 0.0
  %1689 = vmatpush1.xpose.msra.mxu0 0.0
  %1690 = vmatprep.subr.mxu0 0.0
  %1691 = vmatpush1.xpose.msra.mxu0 0.0
  %1692 = vmatprep.subr.mxu0 0.0
  %1693 = vmatpush1.xpose.msra.mxu0 0.0
  %1694 = vmatprep.subr.mxu0 0.0
  %1695 = vmatpush1.xpose.msra.mxu0 0.0
  %1696 = vmatprep.subr.mxu0 0.0
  %1697 = vmatpush1.xpose.msra.mxu0 0.0
  %1698 = vmatprep.subr.mxu0 0.0
  %1699 = vmatpush1.xpose.msra.mxu0 0.0
  %1700 = vmatprep.subr.mxu0 0.0
  %v1701 = vand.u32 %v470, 4294901760
  %v1702 = vsub.f32 %v470, %v1701
  %v1703 = vand.u32 %v1702, 4294901760
  %1704 = vmatpush1.xpose.msra.mxu0 %v1703
  %1705 = vmatprep.subr.mxu0 0.0
  %1706 = vmatpush2.xpose.msra.mxu0 0.0
  %1707 = vmatprep.subr.mxu0 0.0
  %1708 = vmatpush2.xpose.msra.mxu0 0.0
  %1709 = vmatprep.subr.mxu0 0.0
  %1710 = vmatpush2.xpose.msra.mxu0 0.0
  %1711 = vmatprep.subr.mxu0 0.0
  %1712 = vmatpush2.xpose.msra.mxu0 0.0
  %1713 = vmatprep.subr.mxu0 0.0
  %1714 = vmatpush2.xpose.msra.mxu0 0.0
  %1715 = vmatprep.subr.mxu0 0.0
  %1716 = vmatpush2.xpose.msra.mxu0 0.0
  %1717 = vmatprep.subr.mxu0 0.0
  %1718 = vmatpush2.xpose.msra.mxu0 0.0
  %1719 = vmatprep.subr.mxu0 0.0
  %1720 = vmatpush2.xpose.msra.mxu0 0.0
  %1721 = vmatprep.subr.mxu0 0.0
  %1722 = vmatpush2.xpose.msra.mxu0 0.0
  %1723 = vmatprep.subr.mxu0 0.0
  %1724 = vmatpush2.xpose.msra.mxu0 0.0
  %1725 = vmatprep.subr.mxu0 0.0
  %1726 = vmatpush2.xpose.msra.mxu0 0.0
  %1727 = vmatprep.subr.mxu0 0.0
  %1728 = vmatpush2.xpose.msra.mxu0 0.0
  %1729 = vmatprep.subr.mxu0 0.0
  %1730 = vmatpush2.xpose.msra.mxu0 0.0
  %1731 = vmatprep.subr.mxu0 0.0
  %1732 = vmatpush2.xpose.msra.mxu0 0.0
  %1733 = vmatprep.subr.mxu0 0.0
  %1734 = vmatpush2.xpose.msra.mxu0 0.0
  %1735 = vmatprep.subr.mxu0 0.0
  %1736 = vmatpush2.xpose.msra.mxu0 0.0
  %1737 = vmatprep.mubr.f32.mxu0 0.0
  %v1738 = vand.u32 %v922, 4294901760
  %1739 = vmatmul.mubr.f32.gmra.mxu0 %v1738
  %v1740 = vpop.f32.mrf.mxu0
  %v1741 = vadd.f32 %v1667, %v1740
  %v1742 = vpop.f32.mrf.mxu0
  %1743 = vdwg.mxu0
  %1744 = vmatprep.subr.mxu0 0.0
  %1745 = vmatpush1.xpose.msra.mxu0 0.0
  %1746 = vmatprep.subr.mxu0 0.0
  %1747 = vmatpush1.xpose.msra.mxu0 0.0
  %1748 = vmatprep.subr.mxu0 0.0
  %1749 = vmatpush1.xpose.msra.mxu0 0.0
  %1750 = vmatprep.subr.mxu0 0.0
  %1751 = vmatpush1.xpose.msra.mxu0 0.0
  %1752 = vmatprep.subr.mxu0 0.0
  %1753 = vmatpush1.xpose.msra.mxu0 0.0
  %1754 = vmatprep.subr.mxu0 0.0
  %1755 = vmatpush1.xpose.msra.mxu0 0.0
  %1756 = vmatprep.subr.mxu0 0.0
  %1757 = vmatpush1.xpose.msra.mxu0 0.0
  %1758 = vmatprep.subr.mxu0 0.0
  %1759 = vmatpush1.xpose.msra.mxu0 0.0
  %1760 = vmatprep.subr.mxu0 0.0
  %1761 = vmatpush1.xpose.msra.mxu0 0.0
  %1762 = vmatprep.subr.mxu0 0.0
  %1763 = vmatpush1.xpose.msra.mxu0 0.0
  %1764 = vmatprep.subr.mxu0 0.0
  %1765 = vmatpush1.xpose.msra.mxu0 0.0
  %1766 = vmatprep.subr.mxu0 0.0
  %1767 = vmatpush1.xpose.msra.mxu0 0.0
  %1768 = vmatprep.subr.mxu0 0.0
  %1769 = vmatpush1.xpose.msra.mxu0 0.0
  %1770 = vmatprep.subr.mxu0 0.0
  %1771 = vmatpush1.xpose.msra.mxu0 0.0
  %1772 = vmatprep.subr.mxu0 0.0
  %1773 = vmatpush1.xpose.msra.mxu0 0.0
  %1774 = vmatprep.subr.mxu0 0.0
  %v1775 = vand.u32 %v470, 4294901760
  %1776 = vmatpush1.xpose.msra.mxu0 %v1775
  %1777 = vmatprep.subr.mxu0 0.0
  %1778 = vmatpush2.xpose.msra.mxu0 0.0
  %1779 = vmatprep.subr.mxu0 0.0
  %1780 = vmatpush2.xpose.msra.mxu0 0.0
  %1781 = vmatprep.subr.mxu0 0.0
  %1782 = vmatpush2.xpose.msra.mxu0 0.0
  %1783 = vmatprep.subr.mxu0 0.0
  %1784 = vmatpush2.xpose.msra.mxu0 0.0
  %1785 = vmatprep.subr.mxu0 0.0
  %1786 = vmatpush2.xpose.msra.mxu0 0.0
  %1787 = vmatprep.subr.mxu0 0.0
  %1788 = vmatpush2.xpose.msra.mxu0 0.0
  %1789 = vmatprep.subr.mxu0 0.0
  %1790 = vmatpush2.xpose.msra.mxu0 0.0
  %1791 = vmatprep.subr.mxu0 0.0
  %1792 = vmatpush2.xpose.msra.mxu0 0.0
  %1793 = vmatprep.subr.mxu0 0.0
  %1794 = vmatpush2.xpose.msra.mxu0 0.0
  %1795 = vmatprep.subr.mxu0 0.0
  %1796 = vmatpush2.xpose.msra.mxu0 0.0
  %1797 = vmatprep.subr.mxu0 0.0
  %1798 = vmatpush2.xpose.msra.mxu0 0.0
  %1799 = vmatprep.subr.mxu0 0.0
  %1800 = vmatpush2.xpose.msra.mxu0 0.0
  %1801 = vmatprep.subr.mxu0 0.0
  %1802 = vmatpush2.xpose.msra.mxu0 0.0
  %1803 = vmatprep.subr.mxu0 0.0
  %1804 = vmatpush2.xpose.msra.mxu0 0.0
  %1805 = vmatprep.subr.mxu0 0.0
  %1806 = vmatpush2.xpose.msra.mxu0 0.0
  %1807 = vmatprep.subr.mxu0 0.0
  %1808 = vmatpush2.xpose.msra.mxu0 0.0
  %1809 = vmatprep.mubr.f32.mxu0 0.0
  %v1810 = vand.u32 %v922, 4294901760
  %1811 = vmatmul.mubr.f32.gmra.mxu0 %v1810
  %v1812 = vpop.f32.mrf.mxu0
  %v1813 = vadd.f32 %v1741, %v1812
  %v1814 = vpop.f32.mrf.mxu0
  %1815 = vdwg.mxu0
  %v1816 = vtanh.pop %v1367
  %v1817 = vtanh.pop %v1813
  %1818 = vset.pattern.permute.xlu0 22
  %1819 = vperm.xlu0 %1818, %v13
  %v1820 = vpop.permute.xlu0 %1819
  %1822 = vrot.lane.b32.xlu0 %v13, 121
  %v1823 = vpop.permute.xlu0 %1822
  %v1824 = vsel %vm17, %v1823, 0
  %vm1826 = vcmask 1046528
  %v1828 = vsel %vm1826, %v1816, 0
  %1830 = vmatprep.subr.mxu0 0.0
  %1831 = vmatpush1.msra.mxu0 0.0
  %1832 = vmatprep.subr.mxu0 0.0
  %1833 = vmatpush1.msra.mxu0 0.0
  %1834 = vmatprep.subr.mxu0 0.0
  %1835 = vmatpush1.msra.mxu0 0.0
  %1836 = vmatprep.subr.mxu0 0.0
  %1837 = vmatpush1.msra.mxu0 0.0
  %1838 = vmatprep.subr.mxu0 0.0
  %1839 = vmatpush1.msra.mxu0 0.0
  %1840 = vmatprep.subr.mxu0 0.0
  %1841 = vmatpush1.msra.mxu0 0.0
  %1842 = vmatprep.subr.mxu0 0.0
  %1843 = vmatpush1.msra.mxu0 0.0
  %1844 = vmatprep.subr.mxu0 0.0
  %1845 = vmatpush1.msra.mxu0 0.0
  %1846 = vmatprep.subr.mxu0 0.0
  %1847 = vmatpush1.msra.mxu0 0.0
  %1848 = vmatprep.subr.mxu0 0.0
  %1849 = vmatpush1.msra.mxu0 0.0
  %1850 = vmatprep.subr.mxu0 0.0
  %1851 = vmatpush1.msra.mxu0 0.0
  %1852 = vmatprep.subr.mxu0 0.0
  %1853 = vmatpush1.msra.mxu0 0.0
  %1854 = vmatprep.subr.mxu0 0.0
  %1855 = vmatpush1.msra.mxu0 0.0
  %1856 = vmatprep.subr.mxu0 0.0
  %1857 = vmatpush1.msra.mxu0 0.0
  %1858 = vmatprep.subr.mxu0 0.0
  %1859 = vmatpush1.msra.mxu0 0.0
  %1860 = vmatprep.subr.mxu0 0.0
  %v1861 = vand.u32 %v1828, 4294901760
  %1862 = vmatpush1.msra.mxu0 %v1861
  %1863 = vmatprep.subr.mxu0 0.0
  %1864 = vmatpush2.msra.mxu0 0.0
  %1865 = vmatprep.subr.mxu0 0.0
  %1866 = vmatpush2.msra.mxu0 0.0
  %1867 = vmatprep.subr.mxu0 0.0
  %1868 = vmatpush2.msra.mxu0 0.0
  %1869 = vmatprep.subr.mxu0 0.0
  %1870 = vmatpush2.msra.mxu0 0.0
  %1871 = vmatprep.subr.mxu0 0.0
  %1872 = vmatpush2.msra.mxu0 0.0
  %1873 = vmatprep.subr.mxu0 0.0
  %1874 = vmatpush2.msra.mxu0 0.0
  %1875 = vmatprep.subr.mxu0 0.0
  %1876 = vmatpush2.msra.mxu0 0.0
  %1877 = vmatprep.subr.mxu0 0.0
  %1878 = vmatpush2.msra.mxu0 0.0
  %1879 = vmatprep.subr.mxu0 0.0
  %1880 = vmatpush2.msra.mxu0 0.0
  %1881 = vmatprep.subr.mxu0 0.0
  %1882 = vmatpush2.msra.mxu0 0.0
  %1883 = vmatprep.subr.mxu0 0.0
  %1884 = vmatpush2.msra.mxu0 0.0
  %1885 = vmatprep.subr.mxu0 0.0
  %1886 = vmatpush2.msra.mxu0 0.0
  %1887 = vmatprep.subr.mxu0 0.0
  %1888 = vmatpush2.msra.mxu0 0.0
  %1889 = vmatprep.subr.mxu0 0.0
  %1890 = vmatpush2.msra.mxu0 0.0
  %1891 = vmatprep.subr.mxu0 0.0
  %1892 = vmatpush2.msra.mxu0 0.0
  %1893 = vmatprep.subr.mxu0 0.0
  %1894 = vmatpush2.msra.mxu0 0.0
  %1895 = vmatprep.mubr.f32.mxu0 0.0
  %v1896 = vand.u32 %v1824, 4294901760
  %v1897 = vsub.f32 %v1824, %v1896
  %v1898 = vand.u32 %v1897, 4294901760
  %v1899 = vsub.f32 %v1897, %v1898
  %v1900 = vand.u32 %v1899, 4294901760
  %1901 = vmatmul.mubr.f32.gmra.mxu0 %v1900
  %v1902 = vpop.f32.mrf.mxu0
  %v1903 = vadd.f32 %v1820, %v1902
  %v1904 = vpop.f32.mrf.mxu0
  %1905 = vdwg.mxu0
  %1906 = vmatprep.subr.mxu0 0.0
  %1907 = vmatpush1.msra.mxu0 0.0
  %1908 = vmatprep.subr.mxu0 0.0
  %1909 = vmatpush1.msra.mxu0 0.0
  %1910 = vmatprep.subr.mxu0 0.0
  %1911 = vmatpush1.msra.mxu0 0.0
  %1912 = vmatprep.subr.mxu0 0.0
  %1913 = vmatpush1.msra.mxu0 0.0
  %1914 = vmatprep.subr.mxu0 0.0
  %1915 = vmatpush1.msra.mxu0 0.0
  %1916 = vmatprep.subr.mxu0 0.0
  %1917 = vmatpush1.msra.mxu0 0.0
  %1918 = vmatprep.subr.mxu0 0.0
  %1919 = vmatpush1.msra.mxu0 0.0
  %1920 = vmatprep.subr.mxu0 0.0
  %1921 = vmatpush1.msra.mxu0 0.0
  %1922 = vmatprep.subr.mxu0 0.0
  %1923 = vmatpush1.msra.mxu0 0.0
  %1924 = vmatprep.subr.mxu0 0.0
  %1925 = vmatpush1.msra.mxu0 0.0
  %1926 = vmatprep.subr.mxu0 0.0
  %1927 = vmatpush1.msra.mxu0 0.0
  %1928 = vmatprep.subr.mxu0 0.0
  %1929 = vmatpush1.msra.mxu0 0.0
  %1930 = vmatprep.subr.mxu0 0.0
  %1931 = vmatpush1.msra.mxu0 0.0
  %1932 = vmatprep.subr.mxu0 0.0
  %1933 = vmatpush1.msra.mxu0 0.0
  %1934 = vmatprep.subr.mxu0 0.0
  %1935 = vmatpush1.msra.mxu0 0.0
  %1936 = vmatprep.subr.mxu0 0.0
  %v1937 = vand.u32 %v1828, 4294901760
  %v1938 = vsub.f32 %v1828, %v1937
  %v1939 = vand.u32 %v1938, 4294901760
  %v1940 = vsub.f32 %v1938, %v1939
  %v1941 = vand.u32 %v1940, 4294901760
  %1942 = vmatpush1.msra.mxu0 %v1941
  %1943 = vmatprep.subr.mxu0 0.0
  %1944 = vmatpush2.msra.mxu0 0.0
  %1945 = vmatprep.subr.mxu0 0.0
  %1946 = vmatpush2.msra.mxu0 0.0
  %1947 = vmatprep.subr.mxu0 0.0
  %1948 = vmatpush2.msra.mxu0 0.0
  %1949 = vmatprep.subr.mxu0 0.0
  %1950 = vmatpush2.msra.mxu0 0.0
  %1951 = vmatprep.subr.mxu0 0.0
  %1952 = vmatpush2.msra.mxu0 0.0
  %1953 = vmatprep.subr.mxu0 0.0
  %1954 = vmatpush2.msra.mxu0 0.0
  %1955 = vmatprep.subr.mxu0 0.0
  %1956 = vmatpush2.msra.mxu0 0.0
  %1957 = vmatprep.subr.mxu0 0.0
  %1958 = vmatpush2.msra.mxu0 0.0
  %1959 = vmatprep.subr.mxu0 0.0
  %1960 = vmatpush2.msra.mxu0 0.0
  %1961 = vmatprep.subr.mxu0 0.0
  %1962 = vmatpush2.msra.mxu0 0.0
  %1963 = vmatprep.subr.mxu0 0.0
  %1964 = vmatpush2.msra.mxu0 0.0
  %1965 = vmatprep.subr.mxu0 0.0
  %1966 = vmatpush2.msra.mxu0 0.0
  %1967 = vmatprep.subr.mxu0 0.0
  %1968 = vmatpush2.msra.mxu0 0.0
  %1969 = vmatprep.subr.mxu0 0.0
  %1970 = vmatpush2.msra.mxu0 0.0
  %1971 = vmatprep.subr.mxu0 0.0
  %1972 = vmatpush2.msra.mxu0 0.0
  %1973 = vmatprep.subr.mxu0 0.0
  %1974 = vmatpush2.msra.mxu0 0.0
  %1975 = vmatprep.mubr.f32.mxu0 0.0
  %v1976 = vand.u32 %v1824, 4294901760
  %1977 = vmatmul.mubr.f32.gmra.mxu0 %v1976
  %v1978 = vpop.f32.mrf.mxu0
  %v1979 = vadd.f32 %v1903, %v1978
  %v1980 = vpop.f32.mrf.mxu0
  %1981 = vdwg.mxu0
  %1982 = vmatprep.subr.mxu0 0.0
  %1983 = vmatpush1.msra.mxu0 0.0
  %1984 = vmatprep.subr.mxu0 0.0
  %1985 = vmatpush1.msra.mxu0 0.0
  %1986 = vmatprep.subr.mxu0 0.0
  %1987 = vmatpush1.msra.mxu0 0.0
  %1988 = vmatprep.subr.mxu0 0.0
  %1989 = vmatpush1.msra.mxu0 0.0
  %1990 = vmatprep.subr.mxu0 0.0
  %1991 = vmatpush1.msra.mxu0 0.0
  %1992 = vmatprep.subr.mxu0 0.0
  %1993 = vmatpush1.msra.mxu0 0.0
  %1994 = vmatprep.subr.mxu0 0.0
  %1995 = vmatpush1.msra.mxu0 0.0
  %1996 = vmatprep.subr.mxu0 0.0
  %1997 = vmatpush1.msra.mxu0 0.0
  %1998 = vmatprep.subr.mxu0 0.0
  %1999 = vmatpush1.msra.mxu0 0.0
  %2000 = vmatprep.subr.mxu0 0.0
  %2001 = vmatpush1.msra.mxu0 0.0
  %2002 = vmatprep.subr.mxu0 0.0
  %2003 = vmatpush1.msra.mxu0 0.0
  %2004 = vmatprep.subr.mxu0 0.0
  %2005 = vmatpush1.msra.mxu0 0.0
  %2006 = vmatprep.subr.mxu0 0.0
  %2007 = vmatpush1.msra.mxu0 0.0
  %2008 = vmatprep.subr.mxu0 0.0
  %2009 = vmatpush1.msra.mxu0 0.0
  %2010 = vmatprep.subr.mxu0 0.0
  %2011 = vmatpush1.msra.mxu0 0.0
  %2012 = vmatprep.subr.mxu0 0.0
  %v2013 = vand.u32 %v1828, 4294901760
  %v2014 = vsub.f32 %v1828, %v2013
  %2015 = vmatpush1.msra.mxu0 %v2014
  %2016 = vmatprep.subr.mxu0 0.0
  %2017 = vmatpush2.msra.mxu0 0.0
  %2018 = vmatprep.subr.mxu0 0.0
  %2019 = vmatpush2.msra.mxu0 0.0
  %2020 = vmatprep.subr.mxu0 0.0
  %2021 = vmatpush2.msra.mxu0 0.0
  %2022 = vmatprep.subr.mxu0 0.0
  %2023 = vmatpush2.msra.mxu0 0.0
  %2024 = vmatprep.subr.mxu0 0.0
  %2025 = vmatpush2.msra.mxu0 0.0
  %2026 = vmatprep.subr.mxu0 0.0
  %2027 = vmatpush2.msra.mxu0 0.0
  %2028 = vmatprep.subr.mxu0 0.0
  %2029 = vmatpush2.msra.mxu0 0.0
  %2030 = vmatprep.subr.mxu0 0.0
  %2031 = vmatpush2.msra.mxu0 0.0
  %2032 = vmatprep.subr.mxu0 0.0
  %2033 = vmatpush2.msra.mxu0 0.0
  %2034 = vmatprep.subr.mxu0 0.0
  %2035 = vmatpush2.msra.mxu0 0.0
  %2036 = vmatprep.subr.mxu0 0.0
  %2037 = vmatpush2.msra.mxu0 0.0
  %2038 = vmatprep.subr.mxu0 0.0
  %2039 = vmatpush2.msra.mxu0 0.0
  %2040 = vmatprep.subr.mxu0 0.0
  %2041 = vmatpush2.msra.mxu0 0.0
  %2042 = vmatprep.subr.mxu0 0.0
  %2043 = vmatpush2.msra.mxu0 0.0
  %2044 = vmatprep.subr.mxu0 0.0
  %2045 = vmatpush2.msra.mxu0 0.0
  %2046 = vmatprep.subr.mxu0 0.0
  %2047 = vmatpush2.msra.mxu0 0.0
  %2048 = vmatprep.mubr.f32.mxu0 0.0
  %v2049 = vand.u32 %v1824, 4294901760
  %v2050 = vsub.f32 %v1824, %v2049
  %2051 = vmatmul.mubr.f32.gmra.mxu0 %v2050
  %v2052 = vpop.f32.mrf.mxu0
  %v2053 = vadd.f32 %v1979, %v2052
  %v2054 = vpop.f32.mrf.mxu0
  %2055 = vdwg.mxu0
  %2056 = vmatprep.subr.mxu0 0.0
  %2057 = vmatpush1.msra.mxu0 0.0
  %2058 = vmatprep.subr.mxu0 0.0
  %2059 = vmatpush1.msra.mxu0 0.0
  %2060 = vmatprep.subr.mxu0 0.0
  %2061 = vmatpush1.msra.mxu0 0.0
  %2062 = vmatprep.subr.mxu0 0.0
  %2063 = vmatpush1.msra.mxu0 0.0
  %2064 = vmatprep.subr.mxu0 0.0
  %2065 = vmatpush1.msra.mxu0 0.0
  %2066 = vmatprep.subr.mxu0 0.0
  %2067 = vmatpush1.msra.mxu0 0.0
  %2068 = vmatprep.subr.mxu0 0.0
  %2069 = vmatpush1.msra.mxu0 0.0
  %2070 = vmatprep.subr.mxu0 0.0
  %2071 = vmatpush1.msra.mxu0 0.0
  %2072 = vmatprep.subr.mxu0 0.0
  %2073 = vmatpush1.msra.mxu0 0.0
  %2074 = vmatprep.subr.mxu0 0.0
  %2075 = vmatpush1.msra.mxu0 0.0
  %2076 = vmatprep.subr.mxu0 0.0
  %2077 = vmatpush1.msra.mxu0 0.0
  %2078 = vmatprep.subr.mxu0 0.0
  %2079 = vmatpush1.msra.mxu0 0.0
  %2080 = vmatprep.subr.mxu0 0.0
  %2081 = vmatpush1.msra.mxu0 0.0
  %2082 = vmatprep.subr.mxu0 0.0
  %2083 = vmatpush1.msra.mxu0 0.0
  %2084 = vmatprep.subr.mxu0 0.0
  %2085 = vmatpush1.msra.mxu0 0.0
  %2086 = vmatprep.subr.mxu0 0.0
  %v2087 = vand.u32 %v1828, 4294901760
  %2088 = vmatpush1.msra.mxu0 %v2087
  %2089 = vmatprep.subr.mxu0 0.0
  %2090 = vmatpush2.msra.mxu0 0.0
  %2091 = vmatprep.subr.mxu0 0.0
  %2092 = vmatpush2.msra.mxu0 0.0
  %2093 = vmatprep.subr.mxu0 0.0
  %2094 = vmatpush2.msra.mxu0 0.0
  %2095 = vmatprep.subr.mxu0 0.0
  %2096 = vmatpush2.msra.mxu0 0.0
  %2097 = vmatprep.subr.mxu0 0.0
  %2098 = vmatpush2.msra.mxu0 0.0
  %2099 = vmatprep.subr.mxu0 0.0
  %2100 = vmatpush2.msra.mxu0 0.0
  %2101 = vmatprep.subr.mxu0 0.0
  %2102 = vmatpush2.msra.mxu0 0.0
  %2103 = vmatprep.subr.mxu0 0.0
  %2104 = vmatpush2.msra.mxu0 0.0
  %2105 = vmatprep.subr.mxu0 0.0
  %2106 = vmatpush2.msra.mxu0 0.0
  %2107 = vmatprep.subr.mxu0 0.0
  %2108 = vmatpush2.msra.mxu0 0.0
  %2109 = vmatprep.subr.mxu0 0.0
  %2110 = vmatpush2.msra.mxu0 0.0
  %2111 = vmatprep.subr.mxu0 0.0
  %2112 = vmatpush2.msra.mxu0 0.0
  %2113 = vmatprep.subr.mxu0 0.0
  %2114 = vmatpush2.msra.mxu0 0.0
  %2115 = vmatprep.subr.mxu0 0.0
  %2116 = vmatpush2.msra.mxu0 0.0
  %2117 = vmatprep.subr.mxu0 0.0
  %2118 = vmatpush2.msra.mxu0 0.0
  %2119 = vmatprep.subr.mxu0 0.0
  %2120 = vmatpush2.msra.mxu0 0.0
  %2121 = vmatprep.mubr.f32.mxu0 0.0
  %v2122 = vand.u32 %v1824, 4294901760
  %v2123 = vsub.f32 %v1824, %v2122
  %v2124 = vand.u32 %v2123, 4294901760
  %2125 = vmatmul.mubr.f32.gmra.mxu0 %v2124
  %v2126 = vpop.f32.mrf.mxu0
  %v2127 = vadd.f32 %v2053, %v2126
  %v2128 = vpop.f32.mrf.mxu0
  %2129 = vdwg.mxu0
  %2130 = vmatprep.subr.mxu0 0.0
  %2131 = vmatpush1.msra.mxu0 0.0
  %2132 = vmatprep.subr.mxu0 0.0
  %2133 = vmatpush1.msra.mxu0 0.0
  %2134 = vmatprep.subr.mxu0 0.0
  %2135 = vmatpush1.msra.mxu0 0.0
  %2136 = vmatprep.subr.mxu0 0.0
  %2137 = vmatpush1.msra.mxu0 0.0
  %2138 = vmatprep.subr.mxu0 0.0
  %2139 = vmatpush1.msra.mxu0 0.0
  %2140 = vmatprep.subr.mxu0 0.0
  %2141 = vmatpush1.msra.mxu0 0.0
  %2142 = vmatprep.subr.mxu0 0.0
  %2143 = vmatpush1.msra.mxu0 0.0
  %2144 = vmatprep.subr.mxu0 0.0
  %2145 = vmatpush1.msra.mxu0 0.0
  %2146 = vmatprep.subr.mxu0 0.0
  %2147 = vmatpush1.msra.mxu0 0.0
  %2148 = vmatprep.subr.mxu0 0.0
  %2149 = vmatpush1.msra.mxu0 0.0
  %2150 = vmatprep.subr.mxu0 0.0
  %2151 = vmatpush1.msra.mxu0 0.0
  %2152 = vmatprep.subr.mxu0 0.0
  %2153 = vmatpush1.msra.mxu0 0.0
  %2154 = vmatprep.subr.mxu0 0.0
  %2155 = vmatpush1.msra.mxu0 0.0
  %2156 = vmatprep.subr.mxu0 0.0
  %2157 = vmatpush1.msra.mxu0 0.0
  %2158 = vmatprep.subr.mxu0 0.0
  %2159 = vmatpush1.msra.mxu0 0.0
  %2160 = vmatprep.subr.mxu0 0.0
  %v2161 = vand.u32 %v1828, 4294901760
  %v2162 = vsub.f32 %v1828, %v2161
  %v2163 = vand.u32 %v2162, 4294901760
  %2164 = vmatpush1.msra.mxu0 %v2163
  %2165 = vmatprep.subr.mxu0 0.0
  %2166 = vmatpush2.msra.mxu0 0.0
  %2167 = vmatprep.subr.mxu0 0.0
  %2168 = vmatpush2.msra.mxu0 0.0
  %2169 = vmatprep.subr.mxu0 0.0
  %2170 = vmatpush2.msra.mxu0 0.0
  %2171 = vmatprep.subr.mxu0 0.0
  %2172 = vmatpush2.msra.mxu0 0.0
  %2173 = vmatprep.subr.mxu0 0.0
  %2174 = vmatpush2.msra.mxu0 0.0
  %2175 = vmatprep.subr.mxu0 0.0
  %2176 = vmatpush2.msra.mxu0 0.0
  %2177 = vmatprep.subr.mxu0 0.0
  %2178 = vmatpush2.msra.mxu0 0.0
  %2179 = vmatprep.subr.mxu0 0.0
  %2180 = vmatpush2.msra.mxu0 0.0
  %2181 = vmatprep.subr.mxu0 0.0
  %2182 = vmatpush2.msra.mxu0 0.0
  %2183 = vmatprep.subr.mxu0 0.0
  %2184 = vmatpush2.msra.mxu0 0.0
  %2185 = vmatprep.subr.mxu0 0.0
  %2186 = vmatpush2.msra.mxu0 0.0
  %2187 = vmatprep.subr.mxu0 0.0
  %2188 = vmatpush2.msra.mxu0 0.0
  %2189 = vmatprep.subr.mxu0 0.0
  %2190 = vmatpush2.msra.mxu0 0.0
  %2191 = vmatprep.subr.mxu0 0.0
  %2192 = vmatpush2.msra.mxu0 0.0
  %2193 = vmatprep.subr.mxu0 0.0
  %2194 = vmatpush2.msra.mxu0 0.0
  %2195 = vmatprep.subr.mxu0 0.0
  %2196 = vmatpush2.msra.mxu0 0.0
  %2197 = vmatprep.mubr.f32.mxu0 0.0
  %v2198 = vand.u32 %v1824, 4294901760
  %2199 = vmatmul.mubr.f32.gmra.mxu0 %v2198
  %v2200 = vpop.f32.mrf.mxu0
  %v2201 = vadd.f32 %v2127, %v2200
  %v2202 = vpop.f32.mrf.mxu0
  %2203 = vdwg.mxu0
  %2204 = vmatprep.subr.mxu0 0.0
  %2205 = vmatpush1.msra.mxu0 0.0
  %2206 = vmatprep.subr.mxu0 0.0
  %2207 = vmatpush1.msra.mxu0 0.0
  %2208 = vmatprep.subr.mxu0 0.0
  %2209 = vmatpush1.msra.mxu0 0.0
  %2210 = vmatprep.subr.mxu0 0.0
  %2211 = vmatpush1.msra.mxu0 0.0
  %2212 = vmatprep.subr.mxu0 0.0
  %2213 = vmatpush1.msra.mxu0 0.0
  %2214 = vmatprep.subr.mxu0 0.0
  %2215 = vmatpush1.msra.mxu0 0.0
  %2216 = vmatprep.subr.mxu0 0.0
  %2217 = vmatpush1.msra.mxu0 0.0
  %2218 = vmatprep.subr.mxu0 0.0
  %2219 = vmatpush1.msra.mxu0 0.0
  %2220 = vmatprep.subr.mxu0 0.0
  %2221 = vmatpush1.msra.mxu0 0.0
  %2222 = vmatprep.subr.mxu0 0.0
  %2223 = vmatpush1.msra.mxu0 0.0
  %2224 = vmatprep.subr.mxu0 0.0
  %2225 = vmatpush1.msra.mxu0 0.0
  %2226 = vmatprep.subr.mxu0 0.0
  %2227 = vmatpush1.msra.mxu0 0.0
  %2228 = vmatprep.subr.mxu0 0.0
  %2229 = vmatpush1.msra.mxu0 0.0
  %2230 = vmatprep.subr.mxu0 0.0
  %2231 = vmatpush1.msra.mxu0 0.0
  %2232 = vmatprep.subr.mxu0 0.0
  %2233 = vmatpush1.msra.mxu0 0.0
  %2234 = vmatprep.subr.mxu0 0.0
  %v2235 = vand.u32 %v1828, 4294901760
  %2236 = vmatpush1.msra.mxu0 %v2235
  %2237 = vmatprep.subr.mxu0 0.0
  %2238 = vmatpush2.msra.mxu0 0.0
  %2239 = vmatprep.subr.mxu0 0.0
  %2240 = vmatpush2.msra.mxu0 0.0
  %2241 = vmatprep.subr.mxu0 0.0
  %2242 = vmatpush2.msra.mxu0 0.0
  %2243 = vmatprep.subr.mxu0 0.0
  %2244 = vmatpush2.msra.mxu0 0.0
  %2245 = vmatprep.subr.mxu0 0.0
  %2246 = vmatpush2.msra.mxu0 0.0
  %2247 = vmatprep.subr.mxu0 0.0
  %2248 = vmatpush2.msra.mxu0 0.0
  %2249 = vmatprep.subr.mxu0 0.0
  %2250 = vmatpush2.msra.mxu0 0.0
  %2251 = vmatprep.subr.mxu0 0.0
  %2252 = vmatpush2.msra.mxu0 0.0
  %2253 = vmatprep.subr.mxu0 0.0
  %2254 = vmatpush2.msra.mxu0 0.0
  %2255 = vmatprep.subr.mxu0 0.0
  %2256 = vmatpush2.msra.mxu0 0.0
  %2257 = vmatprep.subr.mxu0 0.0
  %2258 = vmatpush2.msra.mxu0 0.0
  %2259 = vmatprep.subr.mxu0 0.0
  %2260 = vmatpush2.msra.mxu0 0.0
  %2261 = vmatprep.subr.mxu0 0.0
  %2262 = vmatpush2.msra.mxu0 0.0
  %2263 = vmatprep.subr.mxu0 0.0
  %2264 = vmatpush2.msra.mxu0 0.0
  %2265 = vmatprep.subr.mxu0 0.0
  %2266 = vmatpush2.msra.mxu0 0.0
  %2267 = vmatprep.subr.mxu0 0.0
  %2268 = vmatpush2.msra.mxu0 0.0
  %2269 = vmatprep.mubr.f32.mxu0 0.0
  %v2270 = vand.u32 %v1824, 4294901760
  %2271 = vmatmul.mubr.f32.gmra.mxu0 %v2270
  %v2272 = vpop.f32.mrf.mxu0
  %v2273 = vadd.f32 %v2201, %v2272
  %v2274 = vpop.f32.mrf.mxu0
  %2275 = vdwg.mxu0
  %v2277 = vsel %vm1826, %v1817, 0
  %2279 = vmatprep.subr.mxu0 0.0
  %2280 = vmatpush1.msra.mxu0 0.0
  %2281 = vmatprep.subr.mxu0 0.0
  %2282 = vmatpush1.msra.mxu0 0.0
  %2283 = vmatprep.subr.mxu0 0.0
  %2284 = vmatpush1.msra.mxu0 0.0
  %2285 = vmatprep.subr.mxu0 0.0
  %2286 = vmatpush1.msra.mxu0 0.0
  %2287 = vmatprep.subr.mxu0 0.0
  %2288 = vmatpush1.msra.mxu0 0.0
  %2289 = vmatprep.subr.mxu0 0.0
  %2290 = vmatpush1.msra.mxu0 0.0
  %2291 = vmatprep.subr.mxu0 0.0
  %2292 = vmatpush1.msra.mxu0 0.0
  %2293 = vmatprep.subr.mxu0 0.0
  %2294 = vmatpush1.msra.mxu0 0.0
  %2295 = vmatprep.subr.mxu0 0.0
  %2296 = vmatpush1.msra.mxu0 0.0
  %2297 = vmatprep.subr.mxu0 0.0
  %2298 = vmatpush1.msra.mxu0 0.0
  %2299 = vmatprep.subr.mxu0 0.0
  %2300 = vmatpush1.msra.mxu0 0.0
  %2301 = vmatprep.subr.mxu0 0.0
  %2302 = vmatpush1.msra.mxu0 0.0
  %2303 = vmatprep.subr.mxu0 0.0
  %2304 = vmatpush1.msra.mxu0 0.0
  %2305 = vmatprep.subr.mxu0 0.0
  %2306 = vmatpush1.msra.mxu0 0.0
  %2307 = vmatprep.subr.mxu0 0.0
  %2308 = vmatpush1.msra.mxu0 0.0
  %2309 = vmatprep.subr.mxu0 0.0
  %v2310 = vand.u32 %v2277, 4294901760
  %2311 = vmatpush1.msra.mxu0 %v2310
  %2312 = vmatprep.subr.mxu0 0.0
  %2313 = vmatpush2.msra.mxu0 0.0
  %2314 = vmatprep.subr.mxu0 0.0
  %2315 = vmatpush2.msra.mxu0 0.0
  %2316 = vmatprep.subr.mxu0 0.0
  %2317 = vmatpush2.msra.mxu0 0.0
  %2318 = vmatprep.subr.mxu0 0.0
  %2319 = vmatpush2.msra.mxu0 0.0
  %2320 = vmatprep.subr.mxu0 0.0
  %2321 = vmatpush2.msra.mxu0 0.0
  %2322 = vmatprep.subr.mxu0 0.0
  %2323 = vmatpush2.msra.mxu0 0.0
  %2324 = vmatprep.subr.mxu0 0.0
  %2325 = vmatpush2.msra.mxu0 0.0
  %2326 = vmatprep.subr.mxu0 0.0
  %2327 = vmatpush2.msra.mxu0 0.0
  %2328 = vmatprep.subr.mxu0 0.0
  %2329 = vmatpush2.msra.mxu0 0.0
  %2330 = vmatprep.subr.mxu0 0.0
  %2331 = vmatpush2.msra.mxu0 0.0
  %2332 = vmatprep.subr.mxu0 0.0
  %2333 = vmatpush2.msra.mxu0 0.0
  %2334 = vmatprep.subr.mxu0 0.0
  %2335 = vmatpush2.msra.mxu0 0.0
  %2336 = vmatprep.subr.mxu0 0.0
  %2337 = vmatpush2.msra.mxu0 0.0
  %2338 = vmatprep.subr.mxu0 0.0
  %2339 = vmatpush2.msra.mxu0 0.0
  %2340 = vmatprep.subr.mxu0 0.0
  %2341 = vmatpush2.msra.mxu0 0.0
  %2342 = vmatprep.subr.mxu0 0.0
  %2343 = vmatpush2.msra.mxu0 0.0
  %2344 = vmatprep.mubr.f32.mxu0 0.0
  %v2345 = vand.u32 %v1824, 4294901760
  %v2346 = vsub.f32 %v1824, %v2345
  %v2347 = vand.u32 %v2346, 4294901760
  %v2348 = vsub.f32 %v2346, %v2347
  %v2349 = vand.u32 %v2348, 4294901760
  %2350 = vmatmul.mubr.f32.gmra.mxu0 %v2349
  %v2351 = vpop.f32.mrf.mxu0
  %v2352 = vadd.f32 %v1820, %v2351
  %v2353 = vpop.f32.mrf.mxu0
  %2354 = vdwg.mxu0
  %2355 = vmatprep.subr.mxu0 0.0
  %2356 = vmatpush1.msra.mxu0 0.0
  %2357 = vmatprep.subr.mxu0 0.0
  %2358 = vmatpush1.msra.mxu0 0.0
  %2359 = vmatprep.subr.mxu0 0.0
  %2360 = vmatpush1.msra.mxu0 0.0
  %2361 = vmatprep.subr.mxu0 0.0
  %2362 = vmatpush1.msra.mxu0 0.0
  %2363 = vmatprep.subr.mxu0 0.0
  %2364 = vmatpush1.msra.mxu0 0.0
  %2365 = vmatprep.subr.mxu0 0.0
  %2366 = vmatpush1.msra.mxu0 0.0
  %2367 = vmatprep.subr.mxu0 0.0
  %2368 = vmatpush1.msra.mxu0 0.0
  %2369 = vmatprep.subr.mxu0 0.0
  %2370 = vmatpush1.msra.mxu0 0.0
  %2371 = vmatprep.subr.mxu0 0.0
  %2372 = vmatpush1.msra.mxu0 0.0
  %2373 = vmatprep.subr.mxu0 0.0
  %2374 = vmatpush1.msra.mxu0 0.0
  %2375 = vmatprep.subr.mxu0 0.0
  %2376 = vmatpush1.msra.mxu0 0.0
  %2377 = vmatprep.subr.mxu0 0.0
  %2378 = vmatpush1.msra.mxu0 0.0
  %2379 = vmatprep.subr.mxu0 0.0
  %2380 = vmatpush1.msra.mxu0 0.0
  %2381 = vmatprep.subr.mxu0 0.0
  %2382 = vmatpush1.msra.mxu0 0.0
  %2383 = vmatprep.subr.mxu0 0.0
  %2384 = vmatpush1.msra.mxu0 0.0
  %2385 = vmatprep.subr.mxu0 0.0
  %v2386 = vand.u32 %v2277, 4294901760
  %v2387 = vsub.f32 %v2277, %v2386
  %v2388 = vand.u32 %v2387, 4294901760
  %v2389 = vsub.f32 %v2387, %v2388
  %v2390 = vand.u32 %v2389, 4294901760
  %2391 = vmatpush1.msra.mxu0 %v2390
  %2392 = vmatprep.subr.mxu0 0.0
  %2393 = vmatpush2.msra.mxu0 0.0
  %2394 = vmatprep.subr.mxu0 0.0
  %2395 = vmatpush2.msra.mxu0 0.0
  %2396 = vmatprep.subr.mxu0 0.0
  %2397 = vmatpush2.msra.mxu0 0.0
  %2398 = vmatprep.subr.mxu0 0.0
  %2399 = vmatpush2.msra.mxu0 0.0
  %2400 = vmatprep.subr.mxu0 0.0
  %2401 = vmatpush2.msra.mxu0 0.0
  %2402 = vmatprep.subr.mxu0 0.0
  %2403 = vmatpush2.msra.mxu0 0.0
  %2404 = vmatprep.subr.mxu0 0.0
  %2405 = vmatpush2.msra.mxu0 0.0
  %2406 = vmatprep.subr.mxu0 0.0
  %2407 = vmatpush2.msra.mxu0 0.0
  %2408 = vmatprep.subr.mxu0 0.0
  %2409 = vmatpush2.msra.mxu0 0.0
  %2410 = vmatprep.subr.mxu0 0.0
  %2411 = vmatpush2.msra.mxu0 0.0
  %2412 = vmatprep.subr.mxu0 0.0
  %2413 = vmatpush2.msra.mxu0 0.0
  %2414 = vmatprep.subr.mxu0 0.0
  %2415 = vmatpush2.msra.mxu0 0.0
  %2416 = vmatprep.subr.mxu0 0.0
  %2417 = vmatpush2.msra.mxu0 0.0
  %2418 = vmatprep.subr.mxu0 0.0
  %2419 = vmatpush2.msra.mxu0 0.0
  %2420 = vmatprep.subr.mxu0 0.0
  %2421 = vmatpush2.msra.mxu0 0.0
  %2422 = vmatprep.subr.mxu0 0.0
  %2423 = vmatpush2.msra.mxu0 0.0
  %2424 = vmatprep.mubr.f32.mxu0 0.0
  %v2425 = vand.u32 %v1824, 4294901760
  %2426 = vmatmul.mubr.f32.gmra.mxu0 %v2425
  %v2427 = vpop.f32.mrf.mxu0
  %v2428 = vadd.f32 %v2352, %v2427
  %v2429 = vpop.f32.mrf.mxu0
  %2430 = vdwg.mxu0
  %2431 = vmatprep.subr.mxu0 0.0
  %2432 = vmatpush1.msra.mxu0 0.0
  %2433 = vmatprep.subr.mxu0 0.0
  %2434 = vmatpush1.msra.mxu0 0.0
  %2435 = vmatprep.subr.mxu0 0.0
  %2436 = vmatpush1.msra.mxu0 0.0
  %2437 = vmatprep.subr.mxu0 0.0
  %2438 = vmatpush1.msra.mxu0 0.0
  %2439 = vmatprep.subr.mxu0 0.0
  %2440 = vmatpush1.msra.mxu0 0.0
  %2441 = vmatprep.subr.mxu0 0.0
  %2442 = vmatpush1.msra.mxu0 0.0
  %2443 = vmatprep.subr.mxu0 0.0
  %2444 = vmatpush1.msra.mxu0 0.0
  %2445 = vmatprep.subr.mxu0 0.0
  %2446 = vmatpush1.msra.mxu0 0.0
  %2447 = vmatprep.subr.mxu0 0.0
  %2448 = vmatpush1.msra.mxu0 0.0
  %2449 = vmatprep.subr.mxu0 0.0
  %2450 = vmatpush1.msra.mxu0 0.0
  %2451 = vmatprep.subr.mxu0 0.0
  %2452 = vmatpush1.msra.mxu0 0.0
  %2453 = vmatprep.subr.mxu0 0.0
  %2454 = vmatpush1.msra.mxu0 0.0
  %2455 = vmatprep.subr.mxu0 0.0
  %2456 = vmatpush1.msra.mxu0 0.0
  %2457 = vmatprep.subr.mxu0 0.0
  %2458 = vmatpush1.msra.mxu0 0.0
  %2459 = vmatprep.subr.mxu0 0.0
  %2460 = vmatpush1.msra.mxu0 0.0
  %2461 = vmatprep.subr.mxu0 0.0
  %v2462 = vand.u32 %v2277, 4294901760
  %v2463 = vsub.f32 %v2277, %v2462
  %2464 = vmatpush1.msra.mxu0 %v2463
  %2465 = vmatprep.subr.mxu0 0.0
  %2466 = vmatpush2.msra.mxu0 0.0
  %2467 = vmatprep.subr.mxu0 0.0
  %2468 = vmatpush2.msra.mxu0 0.0
  %2469 = vmatprep.subr.mxu0 0.0
  %2470 = vmatpush2.msra.mxu0 0.0
  %2471 = vmatprep.subr.mxu0 0.0
  %2472 = vmatpush2.msra.mxu0 0.0
  %2473 = vmatprep.subr.mxu0 0.0
  %2474 = vmatpush2.msra.mxu0 0.0
  %2475 = vmatprep.subr.mxu0 0.0
  %2476 = vmatpush2.msra.mxu0 0.0
  %2477 = vmatprep.subr.mxu0 0.0
  %2478 = vmatpush2.msra.mxu0 0.0
  %2479 = vmatprep.subr.mxu0 0.0
  %2480 = vmatpush2.msra.mxu0 0.0
  %2481 = vmatprep.subr.mxu0 0.0
  %2482 = vmatpush2.msra.mxu0 0.0
  %2483 = vmatprep.subr.mxu0 0.0
  %2484 = vmatpush2.msra.mxu0 0.0
  %2485 = vmatprep.subr.mxu0 0.0
  %2486 = vmatpush2.msra.mxu0 0.0
  %2487 = vmatprep.subr.mxu0 0.0
  %2488 = vmatpush2.msra.mxu0 0.0
  %2489 = vmatprep.subr.mxu0 0.0
  %2490 = vmatpush2.msra.mxu0 0.0
  %2491 = vmatprep.subr.mxu0 0.0
  %2492 = vmatpush2.msra.mxu0 0.0
  %2493 = vmatprep.subr.mxu0 0.0
  %2494 = vmatpush2.msra.mxu0 0.0
  %2495 = vmatprep.subr.mxu0 0.0
  %2496 = vmatpush2.msra.mxu0 0.0
  %2497 = vmatprep.mubr.f32.mxu0 0.0
  %v2498 = vand.u32 %v1824, 4294901760
  %v2499 = vsub.f32 %v1824, %v2498
  %2500 = vmatmul.mubr.f32.gmra.mxu0 %v2499
  %v2501 = vpop.f32.mrf.mxu0
  %v2502 = vadd.f32 %v2428, %v2501
  %v2503 = vpop.f32.mrf.mxu0
  %2504 = vdwg.mxu0
  %2505 = vmatprep.subr.mxu0 0.0
  %2506 = vmatpush1.msra.mxu0 0.0
  %2507 = vmatprep.subr.mxu0 0.0
  %2508 = vmatpush1.msra.mxu0 0.0
  %2509 = vmatprep.subr.mxu0 0.0
  %2510 = vmatpush1.msra.mxu0 0.0
  %2511 = vmatprep.subr.mxu0 0.0
  %2512 = vmatpush1.msra.mxu0 0.0
  %2513 = vmatprep.subr.mxu0 0.0
  %2514 = vmatpush1.msra.mxu0 0.0
  %2515 = vmatprep.subr.mxu0 0.0
  %2516 = vmatpush1.msra.mxu0 0.0
  %2517 = vmatprep.subr.mxu0 0.0
  %2518 = vmatpush1.msra.mxu0 0.0
  %2519 = vmatprep.subr.mxu0 0.0
  %2520 = vmatpush1.msra.mxu0 0.0
  %2521 = vmatprep.subr.mxu0 0.0
  %2522 = vmatpush1.msra.mxu0 0.0
  %2523 = vmatprep.subr.mxu0 0.0
  %2524 = vmatpush1.msra.mxu0 0.0
  %2525 = vmatprep.subr.mxu0 0.0
  %2526 = vmatpush1.msra.mxu0 0.0
  %2527 = vmatprep.subr.mxu0 0.0
  %2528 = vmatpush1.msra.mxu0 0.0
  %2529 = vmatprep.subr.mxu0 0.0
  %2530 = vmatpush1.msra.mxu0 0.0
  %2531 = vmatprep.subr.mxu0 0.0
  %2532 = vmatpush1.msra.mxu0 0.0
  %2533 = vmatprep.subr.mxu0 0.0
  %2534 = vmatpush1.msra.mxu0 0.0
  %2535 = vmatprep.subr.mxu0 0.0
  %v2536 = vand.u32 %v2277, 4294901760
  %2537 = vmatpush1.msra.mxu0 %v2536
  %2538 = vmatprep.subr.mxu0 0.0
  %2539 = vmatpush2.msra.mxu0 0.0
  %2540 = vmatprep.subr.mxu0 0.0
  %2541 = vmatpush2.msra.mxu0 0.0
  %2542 = vmatprep.subr.mxu0 0.0
  %2543 = vmatpush2.msra.mxu0 0.0
  %2544 = vmatprep.subr.mxu0 0.0
  %2545 = vmatpush2.msra.mxu0 0.0
  %2546 = vmatprep.subr.mxu0 0.0
  %2547 = vmatpush2.msra.mxu0 0.0
  %2548 = vmatprep.subr.mxu0 0.0
  %2549 = vmatpush2.msra.mxu0 0.0
  %2550 = vmatprep.subr.mxu0 0.0
  %2551 = vmatpush2.msra.mxu0 0.0
  %2552 = vmatprep.subr.mxu0 0.0
  %2553 = vmatpush2.msra.mxu0 0.0
  %2554 = vmatprep.subr.mxu0 0.0
  %2555 = vmatpush2.msra.mxu0 0.0
  %2556 = vmatprep.subr.mxu0 0.0
  %2557 = vmatpush2.msra.mxu0 0.0
  %2558 = vmatprep.subr.mxu0 0.0
  %2559 = vmatpush2.msra.mxu0 0.0
  %2560 = vmatprep.subr.mxu0 0.0
  %2561 = vmatpush2.msra.mxu0 0.0
  %2562 = vmatprep.subr.mxu0 0.0
  %2563 = vmatpush2.msra.mxu0 0.0
  %2564 = vmatprep.subr.mxu0 0.0
  %2565 = vmatpush2.msra.mxu0 0.0
  %2566 = vmatprep.subr.mxu0 0.0
  %2567 = vmatpush2.msra.mxu0 0.0
  %2568 = vmatprep.subr.mxu0 0.0
  %2569 = vmatpush2.msra.mxu0 0.0
  %2570 = vmatprep.mubr.f32.mxu0 0.0
  %v2571 = vand.u32 %v1824, 4294901760
  %v2572 = vsub.f32 %v1824, %v2571
  %v2573 = vand.u32 %v2572, 4294901760
  %2574 = vmatmul.mubr.f32.gmra.mxu0 %v2573
  %v2575 = vpop.f32.mrf.mxu0
  %v2576 = vadd.f32 %v2502, %v2575
  %v2577 = vpop.f32.mrf.mxu0
  %2578 = vdwg.mxu0
  %2579 = vmatprep.subr.mxu0 0.0
  %2580 = vmatpush1.msra.mxu0 0.0
  %2581 = vmatprep.subr.mxu0 0.0
  %2582 = vmatpush1.msra.mxu0 0.0
  %2583 = vmatprep.subr.mxu0 0.0
  %2584 = vmatpush1.msra.mxu0 0.0
  %2585 = vmatprep.subr.mxu0 0.0
  %2586 = vmatpush1.msra.mxu0 0.0
  %2587 = vmatprep.subr.mxu0 0.0
  %2588 = vmatpush1.msra.mxu0 0.0
  %2589 = vmatprep.subr.mxu0 0.0
  %2590 = vmatpush1.msra.mxu0 0.0
  %2591 = vmatprep.subr.mxu0 0.0
  %2592 = vmatpush1.msra.mxu0 0.0
  %2593 = vmatprep.subr.mxu0 0.0
  %2594 = vmatpush1.msra.mxu0 0.0
  %2595 = vmatprep.subr.mxu0 0.0
  %2596 = vmatpush1.msra.mxu0 0.0
  %2597 = vmatprep.subr.mxu0 0.0
  %2598 = vmatpush1.msra.mxu0 0.0
  %2599 = vmatprep.subr.mxu0 0.0
  %2600 = vmatpush1.msra.mxu0 0.0
  %2601 = vmatprep.subr.mxu0 0.0
  %2602 = vmatpush1.msra.mxu0 0.0
  %2603 = vmatprep.subr.mxu0 0.0
  %2604 = vmatpush1.msra.mxu0 0.0
  %2605 = vmatprep.subr.mxu0 0.0
  %2606 = vmatpush1.msra.mxu0 0.0
  %2607 = vmatprep.subr.mxu0 0.0
  %2608 = vmatpush1.msra.mxu0 0.0
  %2609 = vmatprep.subr.mxu0 0.0
  %v2610 = vand.u32 %v2277, 4294901760
  %v2611 = vsub.f32 %v2277, %v2610
  %v2612 = vand.u32 %v2611, 4294901760
  %2613 = vmatpush1.msra.mxu0 %v2612
  %2614 = vmatprep.subr.mxu0 0.0
  %2615 = vmatpush2.msra.mxu0 0.0
  %2616 = vmatprep.subr.mxu0 0.0
  %2617 = vmatpush2.msra.mxu0 0.0
  %2618 = vmatprep.subr.mxu0 0.0
  %2619 = vmatpush2.msra.mxu0 0.0
  %2620 = vmatprep.subr.mxu0 0.0
  %2621 = vmatpush2.msra.mxu0 0.0
  %2622 = vmatprep.subr.mxu0 0.0
  %2623 = vmatpush2.msra.mxu0 0.0
  %2624 = vmatprep.subr.mxu0 0.0
  %2625 = vmatpush2.msra.mxu0 0.0
  %2626 = vmatprep.subr.mxu0 0.0
  %2627 = vmatpush2.msra.mxu0 0.0
  %2628 = vmatprep.subr.mxu0 0.0
  %2629 = vmatpush2.msra.mxu0 0.0
  %2630 = vmatprep.subr.mxu0 0.0
  %2631 = vmatpush2.msra.mxu0 0.0
  %2632 = vmatprep.subr.mxu0 0.0
  %2633 = vmatpush2.msra.mxu0 0.0
  %2634 = vmatprep.subr.mxu0 0.0
  %2635 = vmatpush2.msra.mxu0 0.0
  %2636 = vmatprep.subr.mxu0 0.0
  %2637 = vmatpush2.msra.mxu0 0.0
  %2638 = vmatprep.subr.mxu0 0.0
  %2639 = vmatpush2.msra.mxu0 0.0
  %2640 = vmatprep.subr.mxu0 0.0
  %2641 = vmatpush2.msra.mxu0 0.0
  %2642 = vmatprep.subr.mxu0 0.0
  %2643 = vmatpush2.msra.mxu0 0.0
  %2644 = vmatprep.subr.mxu0 0.0
  %2645 = vmatpush2.msra.mxu0 0.0
  %2646 = vmatprep.mubr.f32.mxu0 0.0
  %v2647 = vand.u32 %v1824, 4294901760
  %2648 = vmatmul.mubr.f32.gmra.mxu0 %v2647
  %v2649 = vpop.f32.mrf.mxu0
  %v2650 = vadd.f32 %v2576, %v2649
  %v2651 = vpop.f32.mrf.mxu0
  %2652 = vdwg.mxu0
  %2653 = vmatprep.subr.mxu0 0.0
  %2654 = vmatpush1.msra.mxu0 0.0
  %2655 = vmatprep.subr.mxu0 0.0
  %2656 = vmatpush1.msra.mxu0 0.0
  %2657 = vmatprep.subr.mxu0 0.0
  %2658 = vmatpush1.msra.mxu0 0.0
  %2659 = vmatprep.subr.mxu0 0.0
  %2660 = vmatpush1.msra.mxu0 0.0
  %2661 = vmatprep.subr.mxu0 0.0
  %2662 = vmatpush1.msra.mxu0 0.0
  %2663 = vmatprep.subr.mxu0 0.0
  %2664 = vmatpush1.msra.mxu0 0.0
  %2665 = vmatprep.subr.mxu0 0.0
  %2666 = vmatpush1.msra.mxu0 0.0
  %2667 = vmatprep.subr.mxu0 0.0
  %2668 = vmatpush1.msra.mxu0 0.0
  %2669 = vmatprep.subr.mxu0 0.0
  %2670 = vmatpush1.msra.mxu0 0.0
  %2671 = vmatprep.subr.mxu0 0.0
  %2672 = vmatpush1.msra.mxu0 0.0
  %2673 = vmatprep.subr.mxu0 0.0
  %2674 = vmatpush1.msra.mxu0 0.0
  %2675 = vmatprep.subr.mxu0 0.0
  %2676 = vmatpush1.msra.mxu0 0.0
  %2677 = vmatprep.subr.mxu0 0.0
  %2678 = vmatpush1.msra.mxu0 0.0
  %2679 = vmatprep.subr.mxu0 0.0
  %2680 = vmatpush1.msra.mxu0 0.0
  %2681 = vmatprep.subr.mxu0 0.0
  %2682 = vmatpush1.msra.mxu0 0.0
  %2683 = vmatprep.subr.mxu0 0.0
  %v2684 = vand.u32 %v2277, 4294901760
  %2685 = vmatpush1.msra.mxu0 %v2684
  %2686 = vmatprep.subr.mxu0 0.0
  %2687 = vmatpush2.msra.mxu0 0.0
  %2688 = vmatprep.subr.mxu0 0.0
  %2689 = vmatpush2.msra.mxu0 0.0
  %2690 = vmatprep.subr.mxu0 0.0
  %2691 = vmatpush2.msra.mxu0 0.0
  %2692 = vmatprep.subr.mxu0 0.0
  %2693 = vmatpush2.msra.mxu0 0.0
  %2694 = vmatprep.subr.mxu0 0.0
  %2695 = vmatpush2.msra.mxu0 0.0
  %2696 = vmatprep.subr.mxu0 0.0
  %2697 = vmatpush2.msra.mxu0 0.0
  %2698 = vmatprep.subr.mxu0 0.0
  %2699 = vmatpush2.msra.mxu0 0.0
  %2700 = vmatprep.subr.mxu0 0.0
  %2701 = vmatpush2.msra.mxu0 0.0
  %2702 = vmatprep.subr.mxu0 0.0
  %2703 = vmatpush2.msra.mxu0 0.0
  %2704 = vmatprep.subr.mxu0 0.0
  %2705 = vmatpush2.msra.mxu0 0.0
  %2706 = vmatprep.subr.mxu0 0.0
  %2707 = vmatpush2.msra.mxu0 0.0
  %2708 = vmatprep.subr.mxu0 0.0
  %2709 = vmatpush2.msra.mxu0 0.0
  %2710 = vmatprep.subr.mxu0 0.0
  %2711 = vmatpush2.msra.mxu0 0.0
  %2712 = vmatprep.subr.mxu0 0.0
  %2713 = vmatpush2.msra.mxu0 0.0
  %2714 = vmatprep.subr.mxu0 0.0
  %2715 = vmatpush2.msra.mxu0 0.0
  %2716 = vmatprep.subr.mxu0 0.0
  %2717 = vmatpush2.msra.mxu0 0.0
  %2718 = vmatprep.mubr.f32.mxu0 0.0
  %v2719 = vand.u32 %v1824, 4294901760
  %2720 = vmatmul.mubr.f32.gmra.mxu0 %v2719
  %v2721 = vpop.f32.mrf.mxu0
  %v2722 = vadd.f32 %v2650, %v2721
  %v2723 = vpop.f32.mrf.mxu0
  %2724 = vdwg.mxu0
  %vm2725 = vcmask 63488
  %v2726 = vsel %vm2725, %v2273, -inf
  %2727 = vmax.xlane.f32.xlu0 %v2726
  %v2728 = vpop.xlane.xlu0 %2727
  %v2729 = vsel %vm2725, %v2722, -inf
  %2730 = vmax.xlane.f32.xlu0 %v2729
  %v2731 = vpop.xlane.xlu0 %2730
  %v2732 = vsub.f32 %v2273, %v2728
  %v2733 = vsub.f32 %v2722, %v2731
  %v2734 = vmul.f32 %v2732, 1.442695
  %v2735 = vpow.pop %v2734
  %v2736 = vmul.f32 %v2733, 1.442695
  %v2737 = vpow.pop %v2736
  %v2738 = vsel %vm2725, %v2735, 0.0
  %2739 = vadd.xlane.f32.xlu0 %v2738
  %v2740 = vpop.xlane.xlu0 %2739
  %v2741 = vsel %vm2725, %v2737, 0.0
  %2742 = vadd.xlane.f32.xlu0 %v2741
  %v2743 = vpop.xlane.xlu0 %2742
  %v2744 = vrcp.pop %v2740
  %v2745 = vmul.f32 1.0, %v2744
  %v2746 = vrcp.pop %v2743
  %v2747 = vmul.f32 1.0, %v2746
  %v2748 = vmul.f32 %v2735, %v2745
  %v2749 = vmul.f32 %v2737, %v2747
  %v2750 = vmul.f32 %v1816, %v2748
  %v2751 = vmul.f32 %v1817, %v2749
  %v2752 = vsel %vm2725, %v2750, 0.0
  %v2753 = vrot.slane %v2752, 4
  %v2754 = vadd.f32 %v2752, %v2753
  %v2755 = vrot.slane %v2754, 2
  %v2756 = vadd.f32 %v2754, %v2755
  %v2757 = vrot.slane %v2756, 1
  %v2758 = vadd.f32 %v2756, %v2757
  %v2759 = vsel %vm2725, %v2751, 0.0
  %v2760 = vrot.slane %v2759, 4
  %v2761 = vadd.f32 %v2759, %v2760
  %v2762 = vrot.slane %v2761, 2
  %v2763 = vadd.f32 %v2761, %v2762
  %v2764 = vrot.slane %v2763, 1
  %v2765 = vadd.f32 %v2763, %v2764
  %v2766 = vadd.f32 %v2758, 1.0
  %v2767 = vadd.f32 %v2765, 1.0
  %v2768 = vmul.f32 %v466, %v2766
  %v2769 = vmul.f32 %v915, %v2767
  %v2770 = vsel %vm2725, %v2768, 0.0
  %v2771 = vrot.slane %v2770, 4
  %v2772 = vadd.f32 %v2770, %v2771
  %v2773 = vrot.slane %v2772, 2
  %v2774 = vadd.f32 %v2772, %v2773
  %v2775 = vrot.slane %v2774, 1
  %v2776 = vadd.f32 %v2774, %v2775
  %v2777 = vsel %vm2725, %v2769, 0.0
  %v2778 = vrot.slane %v2777, 4
  %v2779 = vadd.f32 %v2777, %v2778
  %v2780 = vrot.slane %v2779, 2
  %v2781 = vadd.f32 %v2779, %v2780
  %v2782 = vrot.slane %v2781, 1
  %v2783 = vadd.f32 %v2781, %v2782
  %v2784 = vrcp.pop 7.0
  %v2785 = vmul.f32 %v2776, %v2784
  %v2786 = vmul.f32 %v2783, %v2784
  %v2787 = vsub.f32 %v2768, %v2785
  %v2788 = vsub.f32 %v2769, %v2786
  %v2789 = vmul.f32 %v2787, %v2787
  %v2790 = vmul.f32 %v2788, %v2788
  %v2791 = vsel %vm2725, %v2789, 0.0
  %v2792 = vrot.slane %v2791, 4
  %v2793 = vadd.f32 %v2791, %v2792
  %v2794 = vrot.slane %v2793, 2
  %v2795 = vadd.f32 %v2793, %v2794
  %v2796 = vrot.slane %v2795, 1
  %v2797 = vadd.f32 %v2795, %v2796
  %v2798 = vsel %vm2725, %v2790, 0.0
  %v2799 = vrot.slane %v2798, 4
  %v2800 = vadd.f32 %v2798, %v2799
  %v2801 = vrot.slane %v2800, 2
  %v2802 = vadd.f32 %v2800, %v2801
  %v2803 = vrot.slane %v2802, 1
  %v2804 = vadd.f32 %v2802, %v2803
  %v2805 = vmul.f32 %v2797, %v2784
  %v2806 = vmul.f32 %v2804, %v2784
  %v2807 = vadd.f32 %v2805, 1e-05
  %v2808 = vadd.f32 %v2806, 1e-05
  %v2809 = vrsqrt.pop %v2807
  %v2810 = vrsqrt.pop %v2808
  %v2811 = vmul.f32 %v2787, %v2809
  %v2812 = vmul.f32 %v2788, %v2810
  %2813 = vset.pattern.permute.xlu0 23
  %2814 = vperm.xlu0 %2813, %v13
  %v2815 = vpop.permute.xlu0 %2814
  %v2817 = vmul.f32 %v2811, %v2815
  %v2818 = vmul.f32 %v2812, %v2815
  %2819 = vset.pattern.permute.xlu0 24
  %2820 = vperm.xlu0 %2819, %v13
  %v2821 = vpop.permute.xlu0 %2820
  %v2823 = vadd.f32 %v2817, %v2821
  %v2824 = vadd.f32 %v2818, %v2821
  %2825 = vst.msk [vmem:[%s2] sm:$0x7f] %vm2725, %v2823
  %2826 = vst.msk [vmem:[%s2 + $0x8] sm:$0x7f] %vm2725, %v2824
  // Predicated region
  $region10: #{tpu_custom_call.1} parent=0 // pred_check
    _
  $region11: #{tpu_custom_call.1} parent=0 // pred_check_branch
    %2828 = sbr.rel (0) target = $region13
  $region12: #{tpu_custom_call.1} parent=0 // pred_region
    _
  $region13: #{tpu_custom_call.1} parent=0 // pred_fallthru
    _
  // Predicated region
  $region14: #{tpu_custom_call.1} parent=0 // pred_check
    _
  $region15: #{tpu_custom_call.1} parent=0 // pred_check_branch
    %2830 = sbr.rel (0) target = $region17
  $region16: #{tpu_custom_call.1} parent=0 // pred_region
    _
  $region17: #{tpu_custom_call.1} parent=0 // pred_fallthru
    _

</llo_original>
